<compile_context>
chip_gen: v7x
topology: tpu7x:2x2x1
jax: 0.10.0
libtpu: 0.0.40
codegen_flags: <defaults>
</compile_context>

<pallas_src>
import functools

import jax
import jax.numpy as jnp
from jax.experimental import pallas as pl
from jax.experimental.pallas import tpu as pltpu


def _lstm_head_kernel(gx_ref, h0_ref, c0_ref, w_hh_ref,
                      w1_ref, b1_ref, w2_ref, b2_ref,
                      pred_ref, h_out_ref, c_out_ref, *, hidden_dim):
    T = gx_ref.shape[0]
    Bp, G = h0_ref.shape                    # G = 4*H = 128 lanes
    H = hidden_dim
    f32 = jnp.float32

    lane = jax.lax.broadcasted_iota(jnp.int32, (Bp, G), 1)
    g_lanes = (lane >= 2 * H) & (lane < 3 * H)      # cell-gate lanes -> tanh; others sigmoid

    w_hh = w_hh_ref[...]                    # (G, G); rows H: are zero (annihilate junk lanes)
    h = h0_ref[...]                         # (Bp, G); lanes 0:H hold the state, rest don't-care
    c = c0_ref[...]

    # Fully unrolled recurrence.  Per step: 1 MXU push (128x128 RHS is loop-invariant), 2 EUP
    # passes (one shared tanh for all gates + tanh(c)), 3 lane rotations, a handful of VPU ops.
    for t in range(T):
        gates = gx_ref[t] + jnp.dot(h, w_hh, preferred_element_type=f32)       # (Bp, G)
        # Single-tanh trick: sigmoid(x) = 0.5*tanh(x/2) + 0.5  -> one transcendental pass
        # covers i/f/o (sigmoid) and g (tanh) lanes.
        th = jnp.tanh(jnp.where(g_lanes, gates, gates * 0.5))
        act = jnp.where(g_lanes, th, 0.5 * th + 0.5)
        # Align the f / g / o gate groups onto lanes 0:H (i already lives there).
        # jnp.roll: element at index j moves to (j + shift) % G.
        f_al = jnp.roll(act, G - H, axis=1)
        g_al = jnp.roll(act, G - 2 * H, axis=1)
        o_al = jnp.roll(act, G - 3 * H, axis=1)
        c = f_al * c + act * g_al           # valid in lanes 0:H; other lanes are bounded junk
        h = o_al * jnp.tanh(c)              # zero rows of w_hh kill the junk on the next matmul

    # Lane-dense stores; wrapper slices [:B, :H] (no in-kernel masking needed).
    h_out_ref[...] = h
    c_out_ref[...] = c

    # Decode head (dropout = identity at eval; BatchNorm folded into the linears as an affine).
    # w1/w2 rows H: are zero, so the junk lanes of h contribute nothing.
    z1 = jnp.dot(h, w1_ref[...], preferred_element_type=f32) + b1_ref[...]
    a1 = jnp.where(z1 > 0, z1, jnp.exp(jnp.minimum(z1, 0.0)) - 1.0)   # ELU(alpha=1), overflow-safe
    z2 = jnp.dot(a1, w2_ref[...], preferred_element_type=f32) + b2_ref[...]
    pred_ref[...] = jax.nn.sigmoid(z2)


def prepare_inference_params(params):
    """One-time (outside jit) weight preparation: embedding projection fused with W_ih,
    BN already folded into the linears, everything zero-padded to 128-lane MXU tiles."""
    f32 = jnp.float32
    H = params["w_hh"].shape[0]
    G = 4 * H
    O = params["w2"].shape[1]

    # Hoist the input projection out of the recurrence and fuse it with the embedding gather:
    # emb[ids] @ W_ih + b == (embeddings @ W_ih + b)[ids].
    proj = jnp.dot(params["embeddings"].astype(f32), params["w_ih"],
                   preferred_element_type=f32, precision="highest") + params["b"]   # (V, 4H)

    w_hh_p = jnp.zeros((G, G), f32).at[:H, :].set(params["w_hh"])
    w1_p = jnp.zeros((G, G), f32).at[:H, :H].set(params["w1"])
    b1_p = jnp.zeros((1, G), f32).at[:, :H].set(params["b1"])
    w2_p = jnp.zeros((G, G), f32).at[:H, :O].set(params["w2"])
    b2_p = jnp.zeros((1, G), f32).at[:, :O].set(params["b2"])

    prep = {"proj": proj, "w_hh": w_hh_p, "w1": w1_p, "b1": b1_p, "w2": w2_p, "b2": b2_p}
    return jax.tree_util.tree_map(jnp.asarray, prep), H, O


@functools.partial(jax.jit, static_argnames=("hidden_dim", "output_size"))
def task1_forward(in_seq, hidden, prep, *, hidden_dim, output_size):
    """in_seq: (T, B) int32 token ids; hidden: (h0, c0) each (1, B, H) float32."""
    h0, c0 = hidden
    T, B = in_seq.shape
    H, O = hidden_dim, output_size
    G = 4 * H
    Bp = max(8, -(-B // 8) * 8)             # pad batch to a full sublane group
    f32 = jnp.float32

    # Embedding lookup on the *pre-projected* table (gather commutes with the matmul).
    # TODO(synk): could be fused into the kernel via SMEM ids + in-kernel row gather; kept as one
    # small XLA gather for robustness.
    ids = jnp.pad(in_seq, ((0, 0), (0, Bp - B)))                        # padded rows use token 0
    gates_x = jnp.take(prep["proj"], ids, axis=0)                       # (T, Bp, 4H)

    def widen_state(s):                                                 # (1, B, H) -> (Bp, G)
        return jnp.zeros((Bp, G), f32).at[:B, :H].set(s[0].astype(f32))

    vmem = pl.BlockSpec(memory_space=pltpu.MemorySpace.VMEM)
    pred_w, h_w, c_w = pl.pallas_call(
        functools.partial(_lstm_head_kernel, hidden_dim=H),
        out_shape=(jax.ShapeDtypeStruct((Bp, G), f32),
                   jax.ShapeDtypeStruct((Bp, G), f32),
                   jax.ShapeDtypeStruct((Bp, G), f32)),
        in_specs=[vmem] * 8,
        out_specs=(vmem, vmem, vmem),
    )(gates_x, widen_state(h0), widen_state(c0),
      prep["w_hh"], prep["w1"], prep["b1"], prep["w2"], prep["b2"])

    pred = pred_w[:B, :O]
    h_n = h_w[:B, :H][None]
    c_n = c_w[:B, :H][None]
    return pred, (h_n, c_n)


def make_params(key, vocab=100, emb_dim=32, hidden_dim=32, output_size=1):
    """Deterministic synthetic parameters matching the module's shapes (weights pre-transposed)."""
    ks = jax.random.split(key, 8)
    f32 = jnp.float32
    H, E, O = hidden_dim, emb_dim, output_size

    embeddings = jax.random.normal(ks[0], (vocab, E), f32)

    # nn.LSTM default init: U(-1/sqrt(H), 1/sqrt(H)); stored transposed for x @ W.
    lim = 1.0 / jnp.sqrt(jnp.asarray(H, f32))
    w_ih = jax.random.uniform(ks[1], (E, 4 * H), f32, -lim, lim)
    w_hh = jax.random.uniform(ks[2], (H, 4 * H), f32, -lim, lim)
    b_ih = jax.random.uniform(ks[3], (4 * H,), f32, -lim, lim)
    b_hh = jax.random.uniform(ks[4], (4 * H,), f32, -lim, lim)
    b = (b_ih + b_hh)[None, :]

    # Decode head: xavier_normal weights, zero bias (init_hidden_params).
    w1 = jax.random.normal(ks[5], (H, H), f32) * jnp.sqrt(2.0 / (H + H))
    b1 = jnp.zeros((H,), f32)
    w2 = jax.random.normal(ks[6], (H, O), f32) * jnp.sqrt(2.0 / (H + O))
    b2 = jnp.zeros((O,), f32)

    # Fold eval-mode BatchNorm1d (gamma=1, beta=0, running_mean=0, running_var=1, eps=1e-5)
    # into the preceding linear: y = (xW+b)*scale + shift.
    eps = 1e-5
    def fold_bn(w, bias, gamma, beta, rmean, rvar):
        scale = gamma / jnp.sqrt(rvar + eps)
        return w * scale[None, :], (bias * scale + (beta - rmean * scale))

    g1, be1, rm1, rv1 = jnp.ones((H,), f32), jnp.zeros((H,), f32), jnp.zeros((H,), f32), jnp.ones((H,), f32)
    g2, be2, rm2, rv2 = jnp.ones((O,), f32), jnp.zeros((O,), f32), jnp.zeros((O,), f32), jnp.ones((O,), f32)
    w1f, b1f = fold_bn(w1, b1, g1, be1, rm1, rv1)
    w2f, b2f = fold_bn(w2, b2, g2, be2, rm2, rv2)

    return {
        "embeddings": embeddings,
        "w_ih": w_ih, "w_hh": w_hh, "b": b,
        "w1": w1f, "b1": b1f[None, :],
        "w2": w2f, "b2": b2f[None, :],
    }


def _reference_forward(in_seq, hidden, params):
    """Pure-JAX (XLA) reference of the same eval-mode forward, for numerical validation."""
    h, c = hidden[0][0], hidden[1][0]
    H = params["w_hh"].shape[0]
    hp = "highest"
    emb = jnp.take(params["embeddings"], in_seq, axis=0)      # (T, B, E)
    for t in range(in_seq.shape[0]):
        gates = (jnp.dot(emb[t], params["w_ih"], precision=hp)
                 + jnp.dot(h, params["w_hh"], precision=hp) + params["b"])
        i = jax.nn.sigmoid(gates[:, 0:H])
        f = jax.nn.sigmoid(gates[:, H:2 * H])
        g = jnp.tanh(gates[:, 2 * H:3 * H])
        o = jax.nn.sigmoid(gates[:, 3 * H:4 * H])
        c = f * c + i * g
        h = o * jnp.tanh(c)
    z1 = jnp.dot(h, params["w1"], precision=hp) + params["b1"]
    a1 = jnp.where(z1 > 0, z1, jnp.exp(jnp.minimum(z1, 0.0)) - 1.0)
    pred = jax.nn.sigmoid(jnp.dot(a1, params["w2"], precision=hp) + params["b2"])
    return pred, (h[None], c[None])


if __name__ == "__main__":
    key = jax.random.PRNGKey(0)
    VOCAB, EMB, HID, OUT = 100, 32, 32, 1
    T, B = 8, 2

    params = make_params(key, vocab=VOCAB, emb_dim=EMB, hidden_dim=HID, output_size=OUT)
    prep, H, O = prepare_inference_params(params)     # one-time weight prep (outside jit)

    in_seq = jax.random.randint(jax.random.fold_in(key, 1), (T, B), 0, VOCAB, dtype=jnp.int32)
    h0 = jnp.zeros((1, B, HID), jnp.float32)   # init_hidden(bsz)
    c0 = jnp.zeros((1, B, HID), jnp.float32)

    pred, (h_n, c_n) = task1_forward(in_seq, (h0, c0), prep, hidden_dim=H, output_size=O)
    jax.block_until_ready((pred, h_n, c_n))

    assert pred.shape == (B, OUT)
    assert h_n.shape == (1, B, HID) and c_n.shape == (1, B, HID)
    assert bool(jnp.all((pred >= 0.0) & (pred <= 1.0)))

    # Cross-check against the pure-JAX reference.
    pred_r, (h_r, c_r) = _reference_forward(in_seq, (h0, c0), params)
    assert bool(jnp.allclose(pred, pred_r, atol=2e-3, rtol=2e-3)), "pred mismatch vs reference"
    assert bool(jnp.allclose(h_n, h_r, atol=2e-3, rtol=2e-3)), "h_n mismatch vs reference"
    assert bool(jnp.allclose(c_n, c_r, atol=2e-3, rtol=2e-3)), "c_n mismatch vs reference"

    print("KERNEL_OK")
</pallas_src>

<mosaic_0001>
module attributes {stable_mosaic.version = 11 : i64} {
  func.func @_lstm_head_kernel(%arg0: memref<8x8x128xf32, #tpu.memory_space<vmem>>, %arg1: memref<8x128xf32, #tpu.memory_space<vmem>>, %arg2: memref<8x128xf32, #tpu.memory_space<vmem>>, %arg3: memref<128x128xf32, #tpu.memory_space<vmem>>, %arg4: memref<128x128xf32, #tpu.memory_space<vmem>>, %arg5: memref<1x128xf32, #tpu.memory_space<vmem>>, %arg6: memref<128x128xf32, #tpu.memory_space<vmem>>, %arg7: memref<1x128xf32, #tpu.memory_space<vmem>>, %arg8: memref<8x128xf32, #tpu.memory_space<vmem>>, %arg9: memref<8x128xf32, #tpu.memory_space<vmem>>, %arg10: memref<8x128xf32, #tpu.memory_space<vmem>>) attributes {dimension_semantics = [], scalar_prefetch = 0 : i64, scratch_operands = 0 : i64, tpu.core_type = #tpu.core_type<tc>} {
    %0 = tpu.iota {dimensions = array<i32: 1>} : vector<8x128xi32>
    %c64_i32 = arith.constant 64 : i32
    %1 = vector.broadcast %c64_i32 : i32 to vector<8x128xi32>
    %2 = arith.cmpi sge, %0, %1 : vector<8x128xi32>
    %c96_i32 = arith.constant 96 : i32
    %3 = vector.broadcast %c96_i32 : i32 to vector<8x128xi32>
    %4 = arith.cmpi slt, %0, %3 : vector<8x128xi32>
    %5 = arith.andi %2, %4 : vector<8x128xi1>
    %c0 = arith.constant 0 : index
    %c0_0 = arith.constant 0 : index
    %6 = vector.load %arg3[%c0, %c0_0] : memref<128x128xf32, #tpu.memory_space<vmem>>, vector<128x128xf32>
    %c0_1 = arith.constant 0 : index
    %c0_2 = arith.constant 0 : index
    %7 = vector.load %arg1[%c0_1, %c0_2] : memref<8x128xf32, #tpu.memory_space<vmem>>, vector<8x128xf32>
    %c0_3 = arith.constant 0 : index
    %c0_4 = arith.constant 0 : index
    %8 = vector.load %arg2[%c0_3, %c0_4] : memref<8x128xf32, #tpu.memory_space<vmem>>, vector<8x128xf32>
    %c0_5 = arith.constant 0 : index
    %c0_6 = arith.constant 0 : index
    %c0_7 = arith.constant 0 : index
    %9 = vector.load %arg0[%c0_5, %c0_6, %c0_7] : memref<8x8x128xf32, #tpu.memory_space<vmem>>, vector<1x8x128xf32>
    %10 = vector.shape_cast %9 : vector<1x8x128xf32> to vector<8x128xf32>
    %cst = arith.constant dense<0.000000e+00> : vector<8x128xf32>
    %11 = tpu.matmul %7, %6, %cst {dimension_numbers = #tpu.dot_dimension_numbers<[1], [0], [0], [1], [0, 0, 1, 1], [], []>} : vector<8x128xf32>, vector<128x128xf32>, vector<8x128xf32> -> vector<8x128xf32>
    %12 = arith.addf %10, %11 : vector<8x128xf32>
    %cst_8 = arith.constant 5.000000e-01 : f32
    %13 = vector.broadcast %cst_8 : f32 to vector<8x128xf32>
    %14 = arith.mulf %12, %13 : vector<8x128xf32>
    %15 = arith.select %5, %12, %14 : vector<8x128xi1>, vector<8x128xf32>
    %16 = math.tanh %15 : vector<8x128xf32>
    %cst_9 = arith.constant 5.000000e-01 : f32
    %17 = vector.broadcast %cst_9 : f32 to vector<8x128xf32>
    %18 = arith.mulf %17, %16 : vector<8x128xf32>
    %cst_10 = arith.constant 5.000000e-01 : f32
    %19 = vector.broadcast %cst_10 : f32 to vector<8x128xf32>
    %20 = arith.addf %18, %19 : vector<8x128xf32>
    %21 = arith.select %5, %16, %20 : vector<8x128xi1>, vector<8x128xf32>
    %22 = vector.extract_strided_slice %21 {offsets = [0, 32], sizes = [8, 96], strides = [1, 1]} : vector<8x128xf32> to vector<8x96xf32>
    %23 = vector.extract_strided_slice %21 {offsets = [0, 0], sizes = [8, 32], strides = [1, 1]} : vector<8x128xf32> to vector<8x32xf32>
    %24 = tpu.concatenate %22, %23 in 1 : vector<8x96xf32>, vector<8x32xf32> -> vector<8x128xf32>
    %25 = vector.extract_strided_slice %21 {offsets = [0, 64], sizes = [8, 64], strides = [1, 1]} : vector<8x128xf32> to vector<8x64xf32>
    %26 = vector.extract_strided_slice %21 {offsets = [0, 0], sizes = [8, 64], strides = [1, 1]} : vector<8x128xf32> to vector<8x64xf32>
    %27 = tpu.concatenate %25, %26 in 1 : vector<8x64xf32>, vector<8x64xf32> -> vector<8x128xf32>
    %28 = vector.extract_strided_slice %21 {offsets = [0, 96], sizes = [8, 32], strides = [1, 1]} : vector<8x128xf32> to vector<8x32xf32>
    %29 = vector.extract_strided_slice %21 {offsets = [0, 0], sizes = [8, 96], strides = [1, 1]} : vector<8x128xf32> to vector<8x96xf32>
    %30 = tpu.concatenate %28, %29 in 1 : vector<8x32xf32>, vector<8x96xf32> -> vector<8x128xf32>
    %31 = arith.mulf %24, %8 : vector<8x128xf32>
    %32 = arith.mulf %21, %27 : vector<8x128xf32>
    %33 = arith.addf %31, %32 : vector<8x128xf32>
    %34 = math.tanh %33 : vector<8x128xf32>
    %35 = arith.mulf %30, %34 : vector<8x128xf32>
    %c1 = arith.constant 1 : index
    %c0_11 = arith.constant 0 : index
    %c0_12 = arith.constant 0 : index
    %36 = vector.load %arg0[%c1, %c0_11, %c0_12] : memref<8x8x128xf32, #tpu.memory_space<vmem>>, vector<1x8x128xf32>
    %37 = vector.shape_cast %36 : vector<1x8x128xf32> to vector<8x128xf32>
    %cst_13 = arith.constant dense<0.000000e+00> : vector<8x128xf32>
    %38 = tpu.matmul %35, %6, %cst_13 {dimension_numbers = #tpu.dot_dimension_numbers<[1], [0], [0], [1], [0, 0, 1, 1], [], []>} : vector<8x128xf32>, vector<128x128xf32>, vector<8x128xf32> -> vector<8x128xf32>
    %39 = arith.addf %37, %38 : vector<8x128xf32>
    %cst_14 = arith.constant 5.000000e-01 : f32
    %40 = vector.broadcast %cst_14 : f32 to vector<8x128xf32>
    %41 = arith.mulf %39, %40 : vector<8x128xf32>
    %42 = arith.select %5, %39, %41 : vector<8x128xi1>, vector<8x128xf32>
    %43 = math.tanh %42 : vector<8x128xf32>
    %cst_15 = arith.constant 5.000000e-01 : f32
    %44 = vector.broadcast %cst_15 : f32 to vector<8x128xf32>
    %45 = arith.mulf %44, %43 : vector<8x128xf32>
    %cst_16 = arith.constant 5.000000e-01 : f32
    %46 = vector.broadcast %cst_16 : f32 to vector<8x128xf32>
    %47 = arith.addf %45, %46 : vector<8x128xf32>
    %48 = arith.select %5, %43, %47 : vector<8x128xi1>, vector<8x128xf32>
    %49 = vector.extract_strided_slice %48 {offsets = [0, 32], sizes = [8, 96], strides = [1, 1]} : vector<8x128xf32> to vector<8x96xf32>
    %50 = vector.extract_strided_slice %48 {offsets = [0, 0], sizes = [8, 32], strides = [1, 1]} : vector<8x128xf32> to vector<8x32xf32>
    %51 = tpu.concatenate %49, %50 in 1 : vector<8x96xf32>, vector<8x32xf32> -> vector<8x128xf32>
    %52 = vector.extract_strided_slice %48 {offsets = [0, 64], sizes = [8, 64], strides = [1, 1]} : vector<8x128xf32> to vector<8x64xf32>
    %53 = vector.extract_strided_slice %48 {offsets = [0, 0], sizes = [8, 64], strides = [1, 1]} : vector<8x128xf32> to vector<8x64xf32>
    %54 = tpu.concatenate %52, %53 in 1 : vector<8x64xf32>, vector<8x64xf32> -> vector<8x128xf32>
    %55 = vector.extract_strided_slice %48 {offsets = [0, 96], sizes = [8, 32], strides = [1, 1]} : vector<8x128xf32> to vector<8x32xf32>
    %56 = vector.extract_strided_slice %48 {offsets = [0, 0], sizes = [8, 96], strides = [1, 1]} : vector<8x128xf32> to vector<8x96xf32>
    %57 = tpu.concatenate %55, %56 in 1 : vector<8x32xf32>, vector<8x96xf32> -> vector<8x128xf32>
    %58 = arith.mulf %51, %33 : vector<8x128xf32>
    %59 = arith.mulf %48, %54 : vector<8x128xf32>
    %60 = arith.addf %58, %59 : vector<8x128xf32>
    %61 = math.tanh %60 : vector<8x128xf32>
    %62 = arith.mulf %57, %61 : vector<8x128xf32>
    %c2 = arith.constant 2 : index
    %c0_17 = arith.constant 0 : index
    %c0_18 = arith.constant 0 : index
    %63 = vector.load %arg0[%c2, %c0_17, %c0_18] : memref<8x8x128xf32, #tpu.memory_space<vmem>>, vector<1x8x128xf32>
    %64 = vector.shape_cast %63 : vector<1x8x128xf32> to vector<8x128xf32>
    %cst_19 = arith.constant dense<0.000000e+00> : vector<8x128xf32>
    %65 = tpu.matmul %62, %6, %cst_19 {dimension_numbers = #tpu.dot_dimension_numbers<[1], [0], [0], [1], [0, 0, 1, 1], [], []>} : vector<8x128xf32>, vector<128x128xf32>, vector<8x128xf32> -> vector<8x128xf32>
    %66 = arith.addf %64, %65 : vector<8x128xf32>
    %cst_20 = arith.constant 5.000000e-01 : f32
    %67 = vector.broadcast %cst_20 : f32 to vector<8x128xf32>
    %68 = arith.mulf %66, %67 : vector<8x128xf32>
    %69 = arith.select %5, %66, %68 : vector<8x128xi1>, vector<8x128xf32>
    %70 = math.tanh %69 : vector<8x128xf32>
    %cst_21 = arith.constant 5.000000e-01 : f32
    %71 = vector.broadcast %cst_21 : f32 to vector<8x128xf32>
    %72 = arith.mulf %71, %70 : vector<8x128xf32>
    %cst_22 = arith.constant 5.000000e-01 : f32
    %73 = vector.broadcast %cst_22 : f32 to vector<8x128xf32>
    %74 = arith.addf %72, %73 : vector<8x128xf32>
    %75 = arith.select %5, %70, %74 : vector<8x128xi1>, vector<8x128xf32>
    %76 = vector.extract_strided_slice %75 {offsets = [0, 32], sizes = [8, 96], strides = [1, 1]} : vector<8x128xf32> to vector<8x96xf32>
    %77 = vector.extract_strided_slice %75 {offsets = [0, 0], sizes = [8, 32], strides = [1, 1]} : vector<8x128xf32> to vector<8x32xf32>
    %78 = tpu.concatenate %76, %77 in 1 : vector<8x96xf32>, vector<8x32xf32> -> vector<8x128xf32>
    %79 = vector.extract_strided_slice %75 {offsets = [0, 64], sizes = [8, 64], strides = [1, 1]} : vector<8x128xf32> to vector<8x64xf32>
    %80 = vector.extract_strided_slice %75 {offsets = [0, 0], sizes = [8, 64], strides = [1, 1]} : vector<8x128xf32> to vector<8x64xf32>
    %81 = tpu.concatenate %79, %80 in 1 : vector<8x64xf32>, vector<8x64xf32> -> vector<8x128xf32>
    %82 = vector.extract_strided_slice %75 {offsets = [0, 96], sizes = [8, 32], strides = [1, 1]} : vector<8x128xf32> to vector<8x32xf32>
    %83 = vector.extract_strided_slice %75 {offsets = [0, 0], sizes = [8, 96], strides = [1, 1]} : vector<8x128xf32> to vector<8x96xf32>
    %84 = tpu.concatenate %82, %83 in 1 : vector<8x32xf32>, vector<8x96xf32> -> vector<8x128xf32>
    %85 = arith.mulf %78, %60 : vector<8x128xf32>
    %86 = arith.mulf %75, %81 : vector<8x128xf32>
    %87 = arith.addf %85, %86 : vector<8x128xf32>
    %88 = math.tanh %87 : vector<8x128xf32>
    %89 = arith.mulf %84, %88 : vector<8x128xf32>
    %c3 = arith.constant 3 : index
    %c0_23 = arith.constant 0 : index
    %c0_24 = arith.constant 0 : index
    %90 = vector.load %arg0[%c3, %c0_23, %c0_24] : memref<8x8x128xf32, #tpu.memory_space<vmem>>, vector<1x8x128xf32>
    %91 = vector.shape_cast %90 : vector<1x8x128xf32> to vector<8x128xf32>
    %cst_25 = arith.constant dense<0.000000e+00> : vector<8x128xf32>
    %92 = tpu.matmul %89, %6, %cst_25 {dimension_numbers = #tpu.dot_dimension_numbers<[1], [0], [0], [1], [0, 0, 1, 1], [], []>} : vector<8x128xf32>, vector<128x128xf32>, vector<8x128xf32> -> vector<8x128xf32>
    %93 = arith.addf %91, %92 : vector<8x128xf32>
    %cst_26 = arith.constant 5.000000e-01 : f32
    %94 = vector.broadcast %cst_26 : f32 to vector<8x128xf32>
    %95 = arith.mulf %93, %94 : vector<8x128xf32>
    %96 = arith.select %5, %93, %95 : vector<8x128xi1>, vector<8x128xf32>
    %97 = math.tanh %96 : vector<8x128xf32>
    %cst_27 = arith.constant 5.000000e-01 : f32
    %98 = vector.broadcast %cst_27 : f32 to vector<8x128xf32>
    %99 = arith.mulf %98, %97 : vector<8x128xf32>
    %cst_28 = arith.constant 5.000000e-01 : f32
    %100 = vector.broadcast %cst_28 : f32 to vector<8x128xf32>
    %101 = arith.addf %99, %100 : vector<8x128xf32>
    %102 = arith.select %5, %97, %101 : vector<8x128xi1>, vector<8x128xf32>
    %103 = vector.extract_strided_slice %102 {offsets = [0, 32], sizes = [8, 96], strides = [1, 1]} : vector<8x128xf32> to vector<8x96xf32>
    %104 = vector.extract_strided_slice %102 {offsets = [0, 0], sizes = [8, 32], strides = [1, 1]} : vector<8x128xf32> to vector<8x32xf32>
    %105 = tpu.concatenate %103, %104 in 1 : vector<8x96xf32>, vector<8x32xf32> -> vector<8x128xf32>
    %106 = vector.extract_strided_slice %102 {offsets = [0, 64], sizes = [8, 64], strides = [1, 1]} : vector<8x128xf32> to vector<8x64xf32>
    %107 = vector.extract_strided_slice %102 {offsets = [0, 0], sizes = [8, 64], strides = [1, 1]} : vector<8x128xf32> to vector<8x64xf32>
    %108 = tpu.concatenate %106, %107 in 1 : vector<8x64xf32>, vector<8x64xf32> -> vector<8x128xf32>
    %109 = vector.extract_strided_slice %102 {offsets = [0, 96], sizes = [8, 32], strides = [1, 1]} : vector<8x128xf32> to vector<8x32xf32>
    %110 = vector.extract_strided_slice %102 {offsets = [0, 0], sizes = [8, 96], strides = [1, 1]} : vector<8x128xf32> to vector<8x96xf32>
    %111 = tpu.concatenate %109, %110 in 1 : vector<8x32xf32>, vector<8x96xf32> -> vector<8x128xf32>
    %112 = arith.mulf %105, %87 : vector<8x128xf32>
    %113 = arith.mulf %102, %108 : vector<8x128xf32>
    %114 = arith.addf %112, %113 : vector<8x128xf32>
    %115 = math.tanh %114 : vector<8x128xf32>
    %116 = arith.mulf %111, %115 : vector<8x128xf32>
    %c4 = arith.constant 4 : index
    %c0_29 = arith.constant 0 : index
    %c0_30 = arith.constant 0 : index
    %117 = vector.load %arg0[%c4, %c0_29, %c0_30] : memref<8x8x128xf32, #tpu.memory_space<vmem>>, vector<1x8x128xf32>
    %118 = vector.shape_cast %117 : vector<1x8x128xf32> to vector<8x128xf32>
    %cst_31 = arith.constant dense<0.000000e+00> : vector<8x128xf32>
    %119 = tpu.matmul %116, %6, %cst_31 {dimension_numbers = #tpu.dot_dimension_numbers<[1], [0], [0], [1], [0, 0, 1, 1], [], []>} : vector<8x128xf32>, vector<128x128xf32>, vector<8x128xf32> -> vector<8x128xf32>
    %120 = arith.addf %118, %119 : vector<8x128xf32>
    %cst_32 = arith.constant 5.000000e-01 : f32
    %121 = vector.broadcast %cst_32 : f32 to vector<8x128xf32>
    %122 = arith.mulf %120, %121 : vector<8x128xf32>
    %123 = arith.select %5, %120, %122 : vector<8x128xi1>, vector<8x128xf32>
    %124 = math.tanh %123 : vector<8x128xf32>
    %cst_33 = arith.constant 5.000000e-01 : f32
    %125 = vector.broadcast %cst_33 : f32 to vector<8x128xf32>
    %126 = arith.mulf %125, %124 : vector<8x128xf32>
    %cst_34 = arith.constant 5.000000e-01 : f32
    %127 = vector.broadcast %cst_34 : f32 to vector<8x128xf32>
    %128 = arith.addf %126, %127 : vector<8x128xf32>
    %129 = arith.select %5, %124, %128 : vector<8x128xi1>, vector<8x128xf32>
    %130 = vector.extract_strided_slice %129 {offsets = [0, 32], sizes = [8, 96], strides = [1, 1]} : vector<8x128xf32> to vector<8x96xf32>
    %131 = vector.extract_strided_slice %129 {offsets = [0, 0], sizes = [8, 32], strides = [1, 1]} : vector<8x128xf32> to vector<8x32xf32>
    %132 = tpu.concatenate %130, %131 in 1 : vector<8x96xf32>, vector<8x32xf32> -> vector<8x128xf32>
    %133 = vector.extract_strided_slice %129 {offsets = [0, 64], sizes = [8, 64], strides = [1, 1]} : vector<8x128xf32> to vector<8x64xf32>
    %134 = vector.extract_strided_slice %129 {offsets = [0, 0], sizes = [8, 64], strides = [1, 1]} : vector<8x128xf32> to vector<8x64xf32>
    %135 = tpu.concatenate %133, %134 in 1 : vector<8x64xf32>, vector<8x64xf32> -> vector<8x128xf32>
    %136 = vector.extract_strided_slice %129 {offsets = [0, 96], sizes = [8, 32], strides = [1, 1]} : vector<8x128xf32> to vector<8x32xf32>
    %137 = vector.extract_strided_slice %129 {offsets = [0, 0], sizes = [8, 96], strides = [1, 1]} : vector<8x128xf32> to vector<8x96xf32>
    %138 = tpu.concatenate %136, %137 in 1 : vector<8x32xf32>, vector<8x96xf32> -> vector<8x128xf32>
    %139 = arith.mulf %132, %114 : vector<8x128xf32>
    %140 = arith.mulf %129, %135 : vector<8x128xf32>
    %141 = arith.addf %139, %140 : vector<8x128xf32>
    %142 = math.tanh %141 : vector<8x128xf32>
    %143 = arith.mulf %138, %142 : vector<8x128xf32>
    %c5 = arith.constant 5 : index
    %c0_35 = arith.constant 0 : index
    %c0_36 = arith.constant 0 : index
    %144 = vector.load %arg0[%c5, %c0_35, %c0_36] : memref<8x8x128xf32, #tpu.memory_space<vmem>>, vector<1x8x128xf32>
    %145 = vector.shape_cast %144 : vector<1x8x128xf32> to vector<8x128xf32>
    %cst_37 = arith.constant dense<0.000000e+00> : vector<8x128xf32>
    %146 = tpu.matmul %143, %6, %cst_37 {dimension_numbers = #tpu.dot_dimension_numbers<[1], [0], [0], [1], [0, 0, 1, 1], [], []>} : vector<8x128xf32>, vector<128x128xf32>, vector<8x128xf32> -> vector<8x128xf32>
    %147 = arith.addf %145, %146 : vector<8x128xf32>
    %cst_38 = arith.constant 5.000000e-01 : f32
    %148 = vector.broadcast %cst_38 : f32 to vector<8x128xf32>
    %149 = arith.mulf %147, %148 : vector<8x128xf32>
    %150 = arith.select %5, %147, %149 : vector<8x128xi1>, vector<8x128xf32>
    %151 = math.tanh %150 : vector<8x128xf32>
    %cst_39 = arith.constant 5.000000e-01 : f32
    %152 = vector.broadcast %cst_39 : f32 to vector<8x128xf32>
    %153 = arith.mulf %152, %151 : vector<8x128xf32>
    %cst_40 = arith.constant 5.000000e-01 : f32
    %154 = vector.broadcast %cst_40 : f32 to vector<8x128xf32>
    %155 = arith.addf %153, %154 : vector<8x128xf32>
    %156 = arith.select %5, %151, %155 : vector<8x128xi1>, vector<8x128xf32>
    %157 = vector.extract_strided_slice %156 {offsets = [0, 32], sizes = [8, 96], strides = [1, 1]} : vector<8x128xf32> to vector<8x96xf32>
    %158 = vector.extract_strided_slice %156 {offsets = [0, 0], sizes = [8, 32], strides = [1, 1]} : vector<8x128xf32> to vector<8x32xf32>
    %159 = tpu.concatenate %157, %158 in 1 : vector<8x96xf32>, vector<8x32xf32> -> vector<8x128xf32>
    %160 = vector.extract_strided_slice %156 {offsets = [0, 64], sizes = [8, 64], strides = [1, 1]} : vector<8x128xf32> to vector<8x64xf32>
    %161 = vector.extract_strided_slice %156 {offsets = [0, 0], sizes = [8, 64], strides = [1, 1]} : vector<8x128xf32> to vector<8x64xf32>
    %162 = tpu.concatenate %160, %161 in 1 : vector<8x64xf32>, vector<8x64xf32> -> vector<8x128xf32>
    %163 = vector.extract_strided_slice %156 {offsets = [0, 96], sizes = [8, 32], strides = [1, 1]} : vector<8x128xf32> to vector<8x32xf32>
    %164 = vector.extract_strided_slice %156 {offsets = [0, 0], sizes = [8, 96], strides = [1, 1]} : vector<8x128xf32> to vector<8x96xf32>
    %165 = tpu.concatenate %163, %164 in 1 : vector<8x32xf32>, vector<8x96xf32> -> vector<8x128xf32>
    %166 = arith.mulf %159, %141 : vector<8x128xf32>
    %167 = arith.mulf %156, %162 : vector<8x128xf32>
    %168 = arith.addf %166, %167 : vector<8x128xf32>
    %169 = math.tanh %168 : vector<8x128xf32>
    %170 = arith.mulf %165, %169 : vector<8x128xf32>
    %c6 = arith.constant 6 : index
    %c0_41 = arith.constant 0 : index
    %c0_42 = arith.constant 0 : index
    %171 = vector.load %arg0[%c6, %c0_41, %c0_42] : memref<8x8x128xf32, #tpu.memory_space<vmem>>, vector<1x8x128xf32>
    %172 = vector.shape_cast %171 : vector<1x8x128xf32> to vector<8x128xf32>
    %cst_43 = arith.constant dense<0.000000e+00> : vector<8x128xf32>
    %173 = tpu.matmul %170, %6, %cst_43 {dimension_numbers = #tpu.dot_dimension_numbers<[1], [0], [0], [1], [0, 0, 1, 1], [], []>} : vector<8x128xf32>, vector<128x128xf32>, vector<8x128xf32> -> vector<8x128xf32>
    %174 = arith.addf %172, %173 : vector<8x128xf32>
    %cst_44 = arith.constant 5.000000e-01 : f32
    %175 = vector.broadcast %cst_44 : f32 to vector<8x128xf32>
    %176 = arith.mulf %174, %175 : vector<8x128xf32>
    %177 = arith.select %5, %174, %176 : vector<8x128xi1>, vector<8x128xf32>
    %178 = math.tanh %177 : vector<8x128xf32>
    %cst_45 = arith.constant 5.000000e-01 : f32
    %179 = vector.broadcast %cst_45 : f32 to vector<8x128xf32>
    %180 = arith.mulf %179, %178 : vector<8x128xf32>
    %cst_46 = arith.constant 5.000000e-01 : f32
    %181 = vector.broadcast %cst_46 : f32 to vector<8x128xf32>
    %182 = arith.addf %180, %181 : vector<8x128xf32>
    %183 = arith.select %5, %178, %182 : vector<8x128xi1>, vector<8x128xf32>
    %184 = vector.extract_strided_slice %183 {offsets = [0, 32], sizes = [8, 96], strides = [1, 1]} : vector<8x128xf32> to vector<8x96xf32>
    %185 = vector.extract_strided_slice %183 {offsets = [0, 0], sizes = [8, 32], strides = [1, 1]} : vector<8x128xf32> to vector<8x32xf32>
    %186 = tpu.concatenate %184, %185 in 1 : vector<8x96xf32>, vector<8x32xf32> -> vector<8x128xf32>
    %187 = vector.extract_strided_slice %183 {offsets = [0, 64], sizes = [8, 64], strides = [1, 1]} : vector<8x128xf32> to vector<8x64xf32>
    %188 = vector.extract_strided_slice %183 {offsets = [0, 0], sizes = [8, 64], strides = [1, 1]} : vector<8x128xf32> to vector<8x64xf32>
    %189 = tpu.concatenate %187, %188 in 1 : vector<8x64xf32>, vector<8x64xf32> -> vector<8x128xf32>
    %190 = vector.extract_strided_slice %183 {offsets = [0, 96], sizes = [8, 32], strides = [1, 1]} : vector<8x128xf32> to vector<8x32xf32>
    %191 = vector.extract_strided_slice %183 {offsets = [0, 0], sizes = [8, 96], strides = [1, 1]} : vector<8x128xf32> to vector<8x96xf32>
    %192 = tpu.concatenate %190, %191 in 1 : vector<8x32xf32>, vector<8x96xf32> -> vector<8x128xf32>
    %193 = arith.mulf %186, %168 : vector<8x128xf32>
    %194 = arith.mulf %183, %189 : vector<8x128xf32>
    %195 = arith.addf %193, %194 : vector<8x128xf32>
    %196 = math.tanh %195 : vector<8x128xf32>
    %197 = arith.mulf %192, %196 : vector<8x128xf32>
    %c7 = arith.constant 7 : index
    %c0_47 = arith.constant 0 : index
    %c0_48 = arith.constant 0 : index
    %198 = vector.load %arg0[%c7, %c0_47, %c0_48] : memref<8x8x128xf32, #tpu.memory_space<vmem>>, vector<1x8x128xf32>
    %199 = vector.shape_cast %198 : vector<1x8x128xf32> to vector<8x128xf32>
    %cst_49 = arith.constant dense<0.000000e+00> : vector<8x128xf32>
    %200 = tpu.matmul %197, %6, %cst_49 {dimension_numbers = #tpu.dot_dimension_numbers<[1], [0], [0], [1], [0, 0, 1, 1], [], []>} : vector<8x128xf32>, vector<128x128xf32>, vector<8x128xf32> -> vector<8x128xf32>
    %201 = arith.addf %199, %200 : vector<8x128xf32>
    %cst_50 = arith.constant 5.000000e-01 : f32
    %202 = vector.broadcast %cst_50 : f32 to vector<8x128xf32>
    %203 = arith.mulf %201, %202 : vector<8x128xf32>
    %204 = arith.select %5, %201, %203 : vector<8x128xi1>, vector<8x128xf32>
    %205 = math.tanh %204 : vector<8x128xf32>
    %cst_51 = arith.constant 5.000000e-01 : f32
    %206 = vector.broadcast %cst_51 : f32 to vector<8x128xf32>
    %207 = arith.mulf %206, %205 : vector<8x128xf32>
    %cst_52 = arith.constant 5.000000e-01 : f32
    %208 = vector.broadcast %cst_52 : f32 to vector<8x128xf32>
    %209 = arith.addf %207, %208 : vector<8x128xf32>
    %210 = arith.select %5, %205, %209 : vector<8x128xi1>, vector<8x128xf32>
    %211 = vector.extract_strided_slice %210 {offsets = [0, 32], sizes = [8, 96], strides = [1, 1]} : vector<8x128xf32> to vector<8x96xf32>
    %212 = vector.extract_strided_slice %210 {offsets = [0, 0], sizes = [8, 32], strides = [1, 1]} : vector<8x128xf32> to vector<8x32xf32>
    %213 = tpu.concatenate %211, %212 in 1 : vector<8x96xf32>, vector<8x32xf32> -> vector<8x128xf32>
    %214 = vector.extract_strided_slice %210 {offsets = [0, 64], sizes = [8, 64], strides = [1, 1]} : vector<8x128xf32> to vector<8x64xf32>
    %215 = vector.extract_strided_slice %210 {offsets = [0, 0], sizes = [8, 64], strides = [1, 1]} : vector<8x128xf32> to vector<8x64xf32>
    %216 = tpu.concatenate %214, %215 in 1 : vector<8x64xf32>, vector<8x64xf32> -> vector<8x128xf32>
    %217 = vector.extract_strided_slice %210 {offsets = [0, 96], sizes = [8, 32], strides = [1, 1]} : vector<8x128xf32> to vector<8x32xf32>
    %218 = vector.extract_strided_slice %210 {offsets = [0, 0], sizes = [8, 96], strides = [1, 1]} : vector<8x128xf32> to vector<8x96xf32>
    %219 = tpu.concatenate %217, %218 in 1 : vector<8x32xf32>, vector<8x96xf32> -> vector<8x128xf32>
    %220 = arith.mulf %213, %195 : vector<8x128xf32>
    %221 = arith.mulf %210, %216 : vector<8x128xf32>
    %222 = arith.addf %220, %221 : vector<8x128xf32>
    %223 = math.tanh %222 : vector<8x128xf32>
    %224 = arith.mulf %219, %223 : vector<8x128xf32>
    %c0_53 = arith.constant 0 : index
    %c0_54 = arith.constant 0 : index
    %225 = vector.load %arg9[%c0_53, %c0_54] : memref<8x128xf32, #tpu.memory_space<vmem>>, vector<8x128xf32>
    tpu.vector_store %arg9[%c0_53, %c0_54], %224 {strides = array<i32>} : memref<8x128xf32, #tpu.memory_space<vmem>>, vector<8x128xf32>,
    %c0_55 = arith.constant 0 : index
    %c0_56 = arith.constant 0 : index
    %226 = vector.load %arg10[%c0_55, %c0_56] : memref<8x128xf32, #tpu.memory_space<vmem>>, vector<8x128xf32>
    tpu.vector_store %arg10[%c0_55, %c0_56], %222 {strides = array<i32>} : memref<8x128xf32, #tpu.memory_space<vmem>>, vector<8x128xf32>,
    %c0_57 = arith.constant 0 : index
    %c0_58 = arith.constant 0 : index
    %227 = vector.load %arg4[%c0_57, %c0_58] : memref<128x128xf32, #tpu.memory_space<vmem>>, vector<128x128xf32>
    %cst_59 = arith.constant dense<0.000000e+00> : vector<8x128xf32>
    %228 = tpu.matmul %224, %227, %cst_59 {dimension_numbers = #tpu.dot_dimension_numbers<[1], [0], [0], [1], [0, 0, 1, 1], [], []>} : vector<8x128xf32>, vector<128x128xf32>, vector<8x128xf32> -> vector<8x128xf32>
    %c0_60 = arith.constant 0 : index
    %c0_61 = arith.constant 0 : index
    %229 = vector.load %arg5[%c0_60, %c0_61] : memref<1x128xf32, #tpu.memory_space<vmem>>, vector<1x128xf32>
    %230 = vector.broadcast %229 : vector<1x128xf32> to vector<8x128xf32>
    %231 = arith.addf %228, %230 : vector<8x128xf32>
    %cst_62 = arith.constant 0.000000e+00 : f32
    %232 = vector.broadcast %cst_62 : f32 to vector<8x128xf32>
    %233 = arith.cmpf ogt, %231, %232 : vector<8x128xf32>
    %cst_63 = arith.constant 0.000000e+00 : f32
    %234 = vector.broadcast %cst_63 : f32 to vector<8x128xf32>
    %235 = arith.minimumf %231, %234 : vector<8x128xf32>
    %236 = math.exp %235 : vector<8x128xf32>
    %cst_64 = arith.constant 1.000000e+00 : f32
    %237 = vector.broadcast %cst_64 : f32 to vector<8x128xf32>
    %238 = arith.subf %236, %237 : vector<8x128xf32>
    %239 = arith.select %233, %231, %238 : vector<8x128xi1>, vector<8x128xf32>
    %c0_65 = arith.constant 0 : index
    %c0_66 = arith.constant 0 : index
    %240 = vector.load %arg6[%c0_65, %c0_66] : memref<128x128xf32, #tpu.memory_space<vmem>>, vector<128x128xf32>
    %cst_67 = arith.constant dense<0.000000e+00> : vector<8x128xf32>
    %241 = tpu.matmul %239, %240, %cst_67 {dimension_numbers = #tpu.dot_dimension_numbers<[1], [0], [0], [1], [0, 0, 1, 1], [], []>} : vector<8x128xf32>, vector<128x128xf32>, vector<8x128xf32> -> vector<8x128xf32>
    %c0_68 = arith.constant 0 : index
    %c0_69 = arith.constant 0 : index
    %242 = vector.load %arg7[%c0_68, %c0_69] : memref<1x128xf32, #tpu.memory_space<vmem>>, vector<1x128xf32>
    %243 = vector.broadcast %242 : vector<1x128xf32> to vector<8x128xf32>
    %244 = arith.addf %241, %243 : vector<8x128xf32>
    %245 = arith.negf %244 : vector<8x128xf32>
    %246 = math.exp %245 : vector<8x128xf32>
    %cst_70 = arith.constant 1.000000e+00 : f32
    %247 = vector.broadcast %cst_70 : f32 to vector<8x128xf32>
    %248 = arith.addf %247, %246 : vector<8x128xf32>
    %249 = arith.divf %247, %248 : vector<8x128xf32>
    %c0_71 = arith.constant 0 : index
    %c0_72 = arith.constant 0 : index
    %250 = vector.load %arg8[%c0_71, %c0_72] : memref<8x128xf32, #tpu.memory_space<vmem>>, vector<8x128xf32>
    tpu.vector_store %arg8[%c0_71, %c0_72], %249 {strides = array<i32>} : memref<8x128xf32, #tpu.memory_space<vmem>>, vector<8x128xf32>,
    return
  }
}

</mosaic_0001>

<llo_original>
// kernel: task1_forward.1
$region0: #{task1_forward.1}
  #allocation0 [shape = 'u32[]', space=smem, size = 0x4, offset = 0x4, fixed_abs, tag = 'smem constant byte address 0x4 - core index']
  #allocation1 [shape = 'u32[144,128]{1,0:T(1,128)}', space=vmem, size = 0x12000, scoped, tag = 'internal scratch']
  %s0 = inlined_call_operand.vmem [shape: f32[8,8,128], index: 0, kind: input, shape index: {}]
  %s1 = inlined_call_operand.vmem [shape: f32[8,128], index: 1, kind: input, shape index: {}]
  %s2 = inlined_call_operand.vmem [shape: f32[8,128], index: 2, kind: input, shape index: {}]
  %s3 = inlined_call_operand.vmem [shape: f32[128,128], index: 3, kind: input, shape index: {}]
  %s4 = inlined_call_operand.vmem [shape: f32[128,128], index: 4, kind: input, shape index: {}]
  %s5 = inlined_call_operand.vmem [shape: f32[1,128], index: 5, kind: input, shape index: {}]
  %s6 = inlined_call_operand.vmem [shape: f32[128,128], index: 6, kind: input, shape index: {}]
  %s7 = inlined_call_operand.vmem [shape: f32[1,128], index: 7, kind: input, shape index: {}]
  %s8 = inlined_call_operand.vmem [shape: f32[8,128], index: 8, kind: output, shape index: {0}]
  %s9 = inlined_call_operand.vmem [shape: f32[8,128], index: 9, kind: output, shape index: {1}]
  %s10 = inlined_call_operand.vmem [shape: f32[8,128], index: 10, kind: output, shape index: {2}]
  %11 = xla_tuple %s8, %s9, %s10
  %s12 = sld [smem:[#allocation0]]
  $region58: #{task1_forward.1} parent=0
    _
  %s14 = ssub.s32 1, %s12
  %s15 = scalar_select 0, %s14, %s12
  // Predicated region
  $region2: #{task1_forward.1} parent=0 // pred_check
    _
  $region3: #{task1_forward.1} parent=0 // pred_check_branch
    %17 = sbr.rel (0) target = $region5
  $region4: #{task1_forward.1} parent=0 // pred_region
    _
  $region5: #{task1_forward.1} parent=0 // pred_fallthru
    _
  // Predicated region
  $region6: #{task1_forward.1} parent=0 // pred_check
    _
  $region7: #{task1_forward.1} parent=0 // pred_check_branch
    %19 = sbr.rel (0) target = $region9
  $region8: #{task1_forward.1} parent=0 // pred_region
    _
  $region9: #{task1_forward.1} parent=0 // pred_fallthru
    _
  // Predicated region
  $region10: #{task1_forward.1} parent=0 // pred_check
    _
  $region11: #{task1_forward.1} parent=0 // pred_check_branch
    %21 = sbr.rel (0) target = $region13
  $region12: #{task1_forward.1} parent=0 // pred_region
    _
  $region13: #{task1_forward.1} parent=0 // pred_fallthru
    _
  // Predicated region
  $region14: #{task1_forward.1} parent=0 // pred_check
    _
  $region15: #{task1_forward.1} parent=0 // pred_check_branch
    %23 = sbr.rel (0) target = $region17
  $region16: #{task1_forward.1} parent=0 // pred_region
    _
  $region17: #{task1_forward.1} parent=0 // pred_fallthru
    _
  // Predicated region
  $region18: #{task1_forward.1} parent=0 // pred_check
    _
  $region19: #{task1_forward.1} parent=0 // pred_check_branch
    %25 = sbr.rel (0) target = $region21
  $region20: #{task1_forward.1} parent=0 // pred_region
    _
  $region21: #{task1_forward.1} parent=0 // pred_fallthru
    _
  // Predicated region
  $region22: #{task1_forward.1} parent=0 // pred_check
    _
  $region23: #{task1_forward.1} parent=0 // pred_check_branch
    %27 = sbr.rel (0) target = $region25
  $region24: #{task1_forward.1} parent=0 // pred_region
    _
  $region25: #{task1_forward.1} parent=0 // pred_fallthru
    _
  // Predicated region
  $region26: #{task1_forward.1} parent=0 // pred_check
    _
  $region27: #{task1_forward.1} parent=0 // pred_check_branch
    %29 = sbr.rel (0) target = $region29
  $region28: #{task1_forward.1} parent=0 // pred_region
    _
  $region29: #{task1_forward.1} parent=0 // pred_fallthru
    _
  // Predicated region
  $region30: #{task1_forward.1} parent=0 // pred_check
    _
  $region31: #{task1_forward.1} parent=0 // pred_check_branch
    %31 = sbr.rel (0) target = $region33
  $region32: #{task1_forward.1} parent=0 // pred_region
    _
  $region33: #{task1_forward.1} parent=0 // pred_fallthru
    _
  %v32 = vlaneseq
  %v33 = vand.u32 %v32, 127
  %vm34 = vcmp.ge.s32.totalorder %v33, 64
  %vm35 = vcmp.lt.s32.totalorder %v33, 96
  %vm36 = vmand %vm34, %vm35
  %v37 = vld [vmem:[%s3] sm:$0xff]
  %v38 = vld [vmem:[%s3 + $0x8] sm:$0xff]
  %v39 = vld [vmem:[%s3 + $0x10] sm:$0xff]
  %v40 = vld [vmem:[%s3 + $0x18] sm:$0xff]
  %v41 = vld [vmem:[%s3 + $0x20] sm:$0xff]
  %v42 = vld [vmem:[%s3 + $0x28] sm:$0xff]
  %v43 = vld [vmem:[%s3 + $0x30] sm:$0xff]
  %v44 = vld [vmem:[%s3 + $0x38] sm:$0xff]
  %v45 = vld [vmem:[%s3 + $0x40] sm:$0xff]
  %v46 = vld [vmem:[%s3 + $0x48] sm:$0xff]
  %v47 = vld [vmem:[%s3 + $0x50] sm:$0xff]
  %v48 = vld [vmem:[%s3 + $0x58] sm:$0xff]
  %v49 = vld [vmem:[%s3 + $0x60] sm:$0xff]
  %v50 = vld [vmem:[%s3 + $0x68] sm:$0xff]
  %v51 = vld [vmem:[%s3 + $0x70] sm:$0xff]
  %v52 = vld [vmem:[%s3 + $0x78] sm:$0xff]
  %v53 = vld [vmem:[%s1] sm:$0xff]
  %v54 = vld [vmem:[%s2] sm:$0xff]
  %v55 = vld [vmem:[%s0] sm:$0xff]
  %56 = vmatprep.subr.mxu0 0.0
  %57 = vmatpush1.msra.mxu0 %v37
  %58 = vmatprep.subr.mxu0 0.0
  %59 = vmatpush1.msra.mxu0 %v38
  %60 = vmatprep.subr.mxu0 0.0
  %61 = vmatpush1.msra.mxu0 %v39
  %62 = vmatprep.subr.mxu0 0.0
  %63 = vmatpush1.msra.mxu0 %v40
  %64 = vmatprep.subr.mxu0 0.0
  %65 = vmatpush1.msra.mxu0 %v41
  %66 = vmatprep.subr.mxu0 0.0
  %67 = vmatpush1.msra.mxu0 %v42
  %68 = vmatprep.subr.mxu0 0.0
  %69 = vmatpush1.msra.mxu0 %v43
  %70 = vmatprep.subr.mxu0 0.0
  %71 = vmatpush1.msra.mxu0 %v44
  %72 = vmatprep.subr.mxu0 0.0
  %73 = vmatpush1.msra.mxu0 %v45
  %74 = vmatprep.subr.mxu0 0.0
  %75 = vmatpush1.msra.mxu0 %v46
  %76 = vmatprep.subr.mxu0 0.0
  %77 = vmatpush1.msra.mxu0 %v47
  %78 = vmatprep.subr.mxu0 0.0
  %79 = vmatpush1.msra.mxu0 %v48
  %80 = vmatprep.subr.mxu0 0.0
  %81 = vmatpush1.msra.mxu0 %v49
  %82 = vmatprep.subr.mxu0 0.0
  %83 = vmatpush1.msra.mxu0 %v50
  %84 = vmatprep.subr.mxu0 0.0
  %85 = vmatpush1.msra.mxu0 %v51
  %86 = vmatprep.subr.mxu0 0.0
  %87 = vmatpush1.msra.mxu0 %v52
  %88 = vmatprep.subr.mxu0 0.0
  %89 = vmatpush1.msra.mxu0 0.0
  %90 = vmatprep.subr.mxu0 0.0
  %91 = vmatpush1.msra.mxu0 0.0
  %92 = vmatprep.subr.mxu0 0.0
  %93 = vmatpush1.msra.mxu0 0.0
  %94 = vmatprep.subr.mxu0 0.0
  %95 = vmatpush1.msra.mxu0 0.0
  %96 = vmatprep.subr.mxu0 0.0
  %97 = vmatpush1.msra.mxu0 0.0
  %98 = vmatprep.subr.mxu0 0.0
  %99 = vmatpush1.msra.mxu0 0.0
  %100 = vmatprep.subr.mxu0 0.0
  %101 = vmatpush1.msra.mxu0 0.0
  %102 = vmatprep.subr.mxu0 0.0
  %103 = vmatpush1.msra.mxu0 0.0
  %104 = vmatprep.subr.mxu0 0.0
  %105 = vmatpush1.msra.mxu0 0.0
  %106 = vmatprep.subr.mxu0 0.0
  %107 = vmatpush1.msra.mxu0 0.0
  %108 = vmatprep.subr.mxu0 0.0
  %109 = vmatpush1.msra.mxu0 0.0
  %110 = vmatprep.subr.mxu0 0.0
  %111 = vmatpush1.msra.mxu0 0.0
  %112 = vmatprep.subr.mxu0 0.0
  %113 = vmatpush1.msra.mxu0 0.0
  %114 = vmatprep.subr.mxu0 0.0
  %115 = vmatpush1.msra.mxu0 0.0
  %116 = vmatprep.subr.mxu0 0.0
  %117 = vmatpush1.msra.mxu0 0.0
  %118 = vmatprep.subr.mxu0 0.0
  %119 = vmatpush1.msra.mxu0 0.0
  %120 = vmatprep.mubr.f32.mxu0 0.0
  %121 = vmatmul.mubr.f32.gmra.mrb[0].mxu0 %v53
  %v122 = vpop.f32.mrb[0].mxu0
  %v123 = vadd.f32 0.0, %v122
  %v124 = vpop.f32.mrb[0].mxu0
  %125 = vdwg.mxu0
  %v126 = vadd.f32 %v55, %v123
  %v127 = vmul.f32 %v126, 0.5
  %v128 = vsel %vm36, %v126, %v127
  %v129 = vtanh.pop %v128
  %v130 = vmul.f32 %v129, 0.5
  %v131 = vadd.f32 %v130, 0.5
  %v132 = vsel %vm36, %v129, %v131
  %134 = vrot.lane.b32.xlu0 %v132, 96
  %v135 = vpop.permute.xlu0 %134
  %137 = vrot.lane.b32.xlu0 %v132, 64
  %v138 = vpop.permute.xlu0 %137
  %140 = vrot.lane.b32.xlu0 %v132, 32
  %v141 = vpop.permute.xlu0 %140
  %v143 = vmul.f32 %v135, %v54
  %v144 = vmul.f32 %v132, %v138
  %v145 = vadd.f32 %v143, %v144
  %v146 = vtanh.pop %v145
  %v147 = vmul.f32 %v141, %v146
  %s148 = scalar_lea.vmem %s0, 8
  %v149 = vld [vmem:[%s148] sm:$0xff]
  %150 = vmatprep.subr.mxu0 0.0
  %151 = vmatpush1.msra.mxu0 %v37
  %152 = vmatprep.subr.mxu0 0.0
  %153 = vmatpush1.msra.mxu0 %v38
  %154 = vmatprep.subr.mxu0 0.0
  %155 = vmatpush1.msra.mxu0 %v39
  %156 = vmatprep.subr.mxu0 0.0
  %157 = vmatpush1.msra.mxu0 %v40
  %158 = vmatprep.subr.mxu0 0.0
  %159 = vmatpush1.msra.mxu0 %v41
  %160 = vmatprep.subr.mxu0 0.0
  %161 = vmatpush1.msra.mxu0 %v42
  %162 = vmatprep.subr.mxu0 0.0
  %163 = vmatpush1.msra.mxu0 %v43
  %164 = vmatprep.subr.mxu0 0.0
  %165 = vmatpush1.msra.mxu0 %v44
  %166 = vmatprep.subr.mxu0 0.0
  %167 = vmatpush1.msra.mxu0 %v45
  %168 = vmatprep.subr.mxu0 0.0
  %169 = vmatpush1.msra.mxu0 %v46
  %170 = vmatprep.subr.mxu0 0.0
  %171 = vmatpush1.msra.mxu0 %v47
  %172 = vmatprep.subr.mxu0 0.0
  %173 = vmatpush1.msra.mxu0 %v48
  %174 = vmatprep.subr.mxu0 0.0
  %175 = vmatpush1.msra.mxu0 %v49
  %176 = vmatprep.subr.mxu0 0.0
  %177 = vmatpush1.msra.mxu0 %v50
  %178 = vmatprep.subr.mxu0 0.0
  %179 = vmatpush1.msra.mxu0 %v51
  %180 = vmatprep.subr.mxu0 0.0
  %181 = vmatpush1.msra.mxu0 %v52
  %182 = vmatprep.subr.mxu0 0.0
  %183 = vmatpush1.msra.mxu0 0.0
  %184 = vmatprep.subr.mxu0 0.0
  %185 = vmatpush1.msra.mxu0 0.0
  %186 = vmatprep.subr.mxu0 0.0
  %187 = vmatpush1.msra.mxu0 0.0
  %188 = vmatprep.subr.mxu0 0.0
  %189 = vmatpush1.msra.mxu0 0.0
  %190 = vmatprep.subr.mxu0 0.0
  %191 = vmatpush1.msra.mxu0 0.0
  %192 = vmatprep.subr.mxu0 0.0
  %193 = vmatpush1.msra.mxu0 0.0
  %194 = vmatprep.subr.mxu0 0.0
  %195 = vmatpush1.msra.mxu0 0.0
  %196 = vmatprep.subr.mxu0 0.0
  %197 = vmatpush1.msra.mxu0 0.0
  %198 = vmatprep.subr.mxu0 0.0
  %199 = vmatpush1.msra.mxu0 0.0
  %200 = vmatprep.subr.mxu0 0.0
  %201 = vmatpush1.msra.mxu0 0.0
  %202 = vmatprep.subr.mxu0 0.0
  %203 = vmatpush1.msra.mxu0 0.0
  %204 = vmatprep.subr.mxu0 0.0
  %205 = vmatpush1.msra.mxu0 0.0
  %206 = vmatprep.subr.mxu0 0.0
  %207 = vmatpush1.msra.mxu0 0.0
  %208 = vmatprep.subr.mxu0 0.0
  %209 = vmatpush1.msra.mxu0 0.0
  %210 = vmatprep.subr.mxu0 0.0
  %211 = vmatpush1.msra.mxu0 0.0
  %212 = vmatprep.subr.mxu0 0.0
  %213 = vmatpush1.msra.mxu0 0.0
  %214 = vmatprep.mubr.f32.mxu0 0.0
  %215 = vmatmul.mubr.f32.gmra.mrb[0].mxu0 %v147
  %v216 = vpop.f32.mrb[0].mxu0
  %v217 = vadd.f32 0.0, %v216
  %v218 = vpop.f32.mrb[0].mxu0
  %219 = vdwg.mxu0
  %v220 = vadd.f32 %v149, %v217
  %v221 = vmul.f32 %v220, 0.5
  %v222 = vsel %vm36, %v220, %v221
  %v223 = vtanh.pop %v222
  %v224 = vmul.f32 %v223, 0.5
  %v225 = vadd.f32 %v224, 0.5
  %v226 = vsel %vm36, %v223, %v225
  %228 = vrot.lane.b32.xlu0 %v226, 96
  %v229 = vpop.permute.xlu0 %228
  %231 = vrot.lane.b32.xlu0 %v226, 64
  %v232 = vpop.permute.xlu0 %231
  %234 = vrot.lane.b32.xlu0 %v226, 32
  %v235 = vpop.permute.xlu0 %234
  %v237 = vmul.f32 %v229, %v145
  %v238 = vmul.f32 %v226, %v232
  %v239 = vadd.f32 %v237, %v238
  %v240 = vtanh.pop %v239
  %v241 = vmul.f32 %v235, %v240
  %s242 = scalar_lea.vmem %s0, 16
  %v243 = vld [vmem:[%s242] sm:$0xff]
  %244 = vmatprep.subr.mxu0 0.0
  %245 = vmatpush1.msra.mxu0 %v37
  %246 = vmatprep.subr.mxu0 0.0
  %247 = vmatpush1.msra.mxu0 %v38
  %248 = vmatprep.subr.mxu0 0.0
  %249 = vmatpush1.msra.mxu0 %v39
  %250 = vmatprep.subr.mxu0 0.0
  %251 = vmatpush1.msra.mxu0 %v40
  %252 = vmatprep.subr.mxu0 0.0
  %253 = vmatpush1.msra.mxu0 %v41
  %254 = vmatprep.subr.mxu0 0.0
  %255 = vmatpush1.msra.mxu0 %v42
  %256 = vmatprep.subr.mxu0 0.0
  %257 = vmatpush1.msra.mxu0 %v43
  %258 = vmatprep.subr.mxu0 0.0
  %259 = vmatpush1.msra.mxu0 %v44
  %260 = vmatprep.subr.mxu0 0.0
  %261 = vmatpush1.msra.mxu0 %v45
  %262 = vmatprep.subr.mxu0 0.0
  %263 = vmatpush1.msra.mxu0 %v46
  %264 = vmatprep.subr.mxu0 0.0
  %265 = vmatpush1.msra.mxu0 %v47
  %266 = vmatprep.subr.mxu0 0.0
  %267 = vmatpush1.msra.mxu0 %v48
  %268 = vmatprep.subr.mxu0 0.0
  %269 = vmatpush1.msra.mxu0 %v49
  %270 = vmatprep.subr.mxu0 0.0
  %271 = vmatpush1.msra.mxu0 %v50
  %272 = vmatprep.subr.mxu0 0.0
  %273 = vmatpush1.msra.mxu0 %v51
  %274 = vmatprep.subr.mxu0 0.0
  %275 = vmatpush1.msra.mxu0 %v52
  %276 = vmatprep.subr.mxu0 0.0
  %277 = vmatpush1.msra.mxu0 0.0
  %278 = vmatprep.subr.mxu0 0.0
  %279 = vmatpush1.msra.mxu0 0.0
  %280 = vmatprep.subr.mxu0 0.0
  %281 = vmatpush1.msra.mxu0 0.0
  %282 = vmatprep.subr.mxu0 0.0
  %283 = vmatpush1.msra.mxu0 0.0
  %284 = vmatprep.subr.mxu0 0.0
  %285 = vmatpush1.msra.mxu0 0.0
  %286 = vmatprep.subr.mxu0 0.0
  %287 = vmatpush1.msra.mxu0 0.0
  %288 = vmatprep.subr.mxu0 0.0
  %289 = vmatpush1.msra.mxu0 0.0
  %290 = vmatprep.subr.mxu0 0.0
  %291 = vmatpush1.msra.mxu0 0.0
  %292 = vmatprep.subr.mxu0 0.0
  %293 = vmatpush1.msra.mxu0 0.0
  %294 = vmatprep.subr.mxu0 0.0
  %295 = vmatpush1.msra.mxu0 0.0
  %296 = vmatprep.subr.mxu0 0.0
  %297 = vmatpush1.msra.mxu0 0.0
  %298 = vmatprep.subr.mxu0 0.0
  %299 = vmatpush1.msra.mxu0 0.0
  %300 = vmatprep.subr.mxu0 0.0
  %301 = vmatpush1.msra.mxu0 0.0
  %302 = vmatprep.subr.mxu0 0.0
  %303 = vmatpush1.msra.mxu0 0.0
  %304 = vmatprep.subr.mxu0 0.0
  %305 = vmatpush1.msra.mxu0 0.0
  %306 = vmatprep.subr.mxu0 0.0
  %307 = vmatpush1.msra.mxu0 0.0
  %308 = vmatprep.mubr.f32.mxu0 0.0
  %309 = vmatmul.mubr.f32.gmra.mrb[0].mxu0 %v241
  %v310 = vpop.f32.mrb[0].mxu0
  %v311 = vadd.f32 0.0, %v310
  %v312 = vpop.f32.mrb[0].mxu0
  %313 = vdwg.mxu0
  %v314 = vadd.f32 %v243, %v311
  %v315 = vmul.f32 %v314, 0.5
  %v316 = vsel %vm36, %v314, %v315
  %v317 = vtanh.pop %v316
  %v318 = vmul.f32 %v317, 0.5
  %v319 = vadd.f32 %v318, 0.5
  %v320 = vsel %vm36, %v317, %v319
  %322 = vrot.lane.b32.xlu0 %v320, 96
  %v323 = vpop.permute.xlu0 %322
  %325 = vrot.lane.b32.xlu0 %v320, 64
  %v326 = vpop.permute.xlu0 %325
  %328 = vrot.lane.b32.xlu0 %v320, 32
  %v329 = vpop.permute.xlu0 %328
  %v331 = vmul.f32 %v323, %v239
  %v332 = vmul.f32 %v320, %v326
  %v333 = vadd.f32 %v331, %v332
  %v334 = vtanh.pop %v333
  %v335 = vmul.f32 %v329, %v334
  %s336 = scalar_lea.vmem %s0, 24
  %v337 = vld [vmem:[%s336] sm:$0xff]
  %338 = vmatprep.subr.mxu0 0.0
  %339 = vmatpush1.msra.mxu0 %v37
  %340 = vmatprep.subr.mxu0 0.0
  %341 = vmatpush1.msra.mxu0 %v38
  %342 = vmatprep.subr.mxu0 0.0
  %343 = vmatpush1.msra.mxu0 %v39
  %344 = vmatprep.subr.mxu0 0.0
  %345 = vmatpush1.msra.mxu0 %v40
  %346 = vmatprep.subr.mxu0 0.0
  %347 = vmatpush1.msra.mxu0 %v41
  %348 = vmatprep.subr.mxu0 0.0
  %349 = vmatpush1.msra.mxu0 %v42
  %350 = vmatprep.subr.mxu0 0.0
  %351 = vmatpush1.msra.mxu0 %v43
  %352 = vmatprep.subr.mxu0 0.0
  %353 = vmatpush1.msra.mxu0 %v44
  %354 = vmatprep.subr.mxu0 0.0
  %355 = vmatpush1.msra.mxu0 %v45
  %356 = vmatprep.subr.mxu0 0.0
  %357 = vmatpush1.msra.mxu0 %v46
  %358 = vmatprep.subr.mxu0 0.0
  %359 = vmatpush1.msra.mxu0 %v47
  %360 = vmatprep.subr.mxu0 0.0
  %361 = vmatpush1.msra.mxu0 %v48
  %362 = vmatprep.subr.mxu0 0.0
  %363 = vmatpush1.msra.mxu0 %v49
  %364 = vmatprep.subr.mxu0 0.0
  %365 = vmatpush1.msra.mxu0 %v50
  %366 = vmatprep.subr.mxu0 0.0
  %367 = vmatpush1.msra.mxu0 %v51
  %368 = vmatprep.subr.mxu0 0.0
  %369 = vmatpush1.msra.mxu0 %v52
  %370 = vmatprep.subr.mxu0 0.0
  %371 = vmatpush1.msra.mxu0 0.0
  %372 = vmatprep.subr.mxu0 0.0
  %373 = vmatpush1.msra.mxu0 0.0
  %374 = vmatprep.subr.mxu0 0.0
  %375 = vmatpush1.msra.mxu0 0.0
  %376 = vmatprep.subr.mxu0 0.0
  %377 = vmatpush1.msra.mxu0 0.0
  %378 = vmatprep.subr.mxu0 0.0
  %379 = vmatpush1.msra.mxu0 0.0
  %380 = vmatprep.subr.mxu0 0.0
  %381 = vmatpush1.msra.mxu0 0.0
  %382 = vmatprep.subr.mxu0 0.0
  %383 = vmatpush1.msra.mxu0 0.0
  %384 = vmatprep.subr.mxu0 0.0
  %385 = vmatpush1.msra.mxu0 0.0
  %386 = vmatprep.subr.mxu0 0.0
  %387 = vmatpush1.msra.mxu0 0.0
  %388 = vmatprep.subr.mxu0 0.0
  %389 = vmatpush1.msra.mxu0 0.0
  %390 = vmatprep.subr.mxu0 0.0
  %391 = vmatpush1.msra.mxu0 0.0
  %392 = vmatprep.subr.mxu0 0.0
  %393 = vmatpush1.msra.mxu0 0.0
  %394 = vmatprep.subr.mxu0 0.0
  %395 = vmatpush1.msra.mxu0 0.0
  %396 = vmatprep.subr.mxu0 0.0
  %397 = vmatpush1.msra.mxu0 0.0
  %398 = vmatprep.subr.mxu0 0.0
  %399 = vmatpush1.msra.mxu0 0.0
  %400 = vmatprep.subr.mxu0 0.0
  %401 = vmatpush1.msra.mxu0 0.0
  %402 = vmatprep.mubr.f32.mxu0 0.0
  %403 = vmatmul.mubr.f32.gmra.mrb[0].mxu0 %v335
  %v404 = vpop.f32.mrb[0].mxu0
  %v405 = vadd.f32 0.0, %v404
  %v406 = vpop.f32.mrb[0].mxu0
  %407 = vdwg.mxu0
  %v408 = vadd.f32 %v337, %v405
  %v409 = vmul.f32 %v408, 0.5
  %v410 = vsel %vm36, %v408, %v409
  %v411 = vtanh.pop %v410
  %v412 = vmul.f32 %v411, 0.5
  %v413 = vadd.f32 %v412, 0.5
  %v414 = vsel %vm36, %v411, %v413
  %416 = vrot.lane.b32.xlu0 %v414, 96
  %v417 = vpop.permute.xlu0 %416
  %419 = vrot.lane.b32.xlu0 %v414, 64
  %v420 = vpop.permute.xlu0 %419
  %422 = vrot.lane.b32.xlu0 %v414, 32
  %v423 = vpop.permute.xlu0 %422
  %v425 = vmul.f32 %v417, %v333
  %v426 = vmul.f32 %v414, %v420
  %v427 = vadd.f32 %v425, %v426
  %v428 = vtanh.pop %v427
  %v429 = vmul.f32 %v423, %v428
  %s430 = scalar_lea.vmem %s0, 32
  %v431 = vld [vmem:[%s430] sm:$0xff]
  %432 = vmatprep.subr.mxu0 0.0
  %433 = vmatpush1.msra.mxu0 %v37
  %434 = vmatprep.subr.mxu0 0.0
  %435 = vmatpush1.msra.mxu0 %v38
  %436 = vmatprep.subr.mxu0 0.0
  %437 = vmatpush1.msra.mxu0 %v39
  %438 = vmatprep.subr.mxu0 0.0
  %439 = vmatpush1.msra.mxu0 %v40
  %440 = vmatprep.subr.mxu0 0.0
  %441 = vmatpush1.msra.mxu0 %v41
  %442 = vmatprep.subr.mxu0 0.0
  %443 = vmatpush1.msra.mxu0 %v42
  %444 = vmatprep.subr.mxu0 0.0
  %445 = vmatpush1.msra.mxu0 %v43
  %446 = vmatprep.subr.mxu0 0.0
  %447 = vmatpush1.msra.mxu0 %v44
  %448 = vmatprep.subr.mxu0 0.0
  %449 = vmatpush1.msra.mxu0 %v45
  %450 = vmatprep.subr.mxu0 0.0
  %451 = vmatpush1.msra.mxu0 %v46
  %452 = vmatprep.subr.mxu0 0.0
  %453 = vmatpush1.msra.mxu0 %v47
  %454 = vmatprep.subr.mxu0 0.0
  %455 = vmatpush1.msra.mxu0 %v48
  %456 = vmatprep.subr.mxu0 0.0
  %457 = vmatpush1.msra.mxu0 %v49
  %458 = vmatprep.subr.mxu0 0.0
  %459 = vmatpush1.msra.mxu0 %v50
  %460 = vmatprep.subr.mxu0 0.0
  %461 = vmatpush1.msra.mxu0 %v51
  %462 = vmatprep.subr.mxu0 0.0
  %463 = vmatpush1.msra.mxu0 %v52
  %464 = vmatprep.subr.mxu0 0.0
  %465 = vmatpush1.msra.mxu0 0.0
  %466 = vmatprep.subr.mxu0 0.0
  %467 = vmatpush1.msra.mxu0 0.0
  %468 = vmatprep.subr.mxu0 0.0
  %469 = vmatpush1.msra.mxu0 0.0
  %470 = vmatprep.subr.mxu0 0.0
  %471 = vmatpush1.msra.mxu0 0.0
  %472 = vmatprep.subr.mxu0 0.0
  %473 = vmatpush1.msra.mxu0 0.0
  %474 = vmatprep.subr.mxu0 0.0
  %475 = vmatpush1.msra.mxu0 0.0
  %476 = vmatprep.subr.mxu0 0.0
  %477 = vmatpush1.msra.mxu0 0.0
  %478 = vmatprep.subr.mxu0 0.0
  %479 = vmatpush1.msra.mxu0 0.0
  %480 = vmatprep.subr.mxu0 0.0
  %481 = vmatpush1.msra.mxu0 0.0
  %482 = vmatprep.subr.mxu0 0.0
  %483 = vmatpush1.msra.mxu0 0.0
  %484 = vmatprep.subr.mxu0 0.0
  %485 = vmatpush1.msra.mxu0 0.0
  %486 = vmatprep.subr.mxu0 0.0
  %487 = vmatpush1.msra.mxu0 0.0
  %488 = vmatprep.subr.mxu0 0.0
  %489 = vmatpush1.msra.mxu0 0.0
  %490 = vmatprep.subr.mxu0 0.0
  %491 = vmatpush1.msra.mxu0 0.0
  %492 = vmatprep.subr.mxu0 0.0
  %493 = vmatpush1.msra.mxu0 0.0
  %494 = vmatprep.subr.mxu0 0.0
  %495 = vmatpush1.msra.mxu0 0.0
  %496 = vmatprep.mubr.f32.mxu0 0.0
  %497 = vmatmul.mubr.f32.gmra.mrb[0].mxu0 %v429
  %v498 = vpop.f32.mrb[0].mxu0
  %v499 = vadd.f32 0.0, %v498
  %v500 = vpop.f32.mrb[0].mxu0
  %501 = vdwg.mxu0
  %v502 = vadd.f32 %v431, %v499
  %v503 = vmul.f32 %v502, 0.5
  %v504 = vsel %vm36, %v502, %v503
  %v505 = vtanh.pop %v504
  %v506 = vmul.f32 %v505, 0.5
  %v507 = vadd.f32 %v506, 0.5
  %v508 = vsel %vm36, %v505, %v507
  %510 = vrot.lane.b32.xlu0 %v508, 96
  %v511 = vpop.permute.xlu0 %510
  %513 = vrot.lane.b32.xlu0 %v508, 64
  %v514 = vpop.permute.xlu0 %513
  %516 = vrot.lane.b32.xlu0 %v508, 32
  %v517 = vpop.permute.xlu0 %516
  %v519 = vmul.f32 %v511, %v427
  %v520 = vmul.f32 %v508, %v514
  %v521 = vadd.f32 %v519, %v520
  %v522 = vtanh.pop %v521
  %v523 = vmul.f32 %v517, %v522
  %s524 = scalar_lea.vmem %s0, 40
  %v525 = vld [vmem:[%s524] sm:$0xff]
  %526 = vmatprep.subr.mxu0 0.0
  %527 = vmatpush1.msra.mxu0 %v37
  %528 = vmatprep.subr.mxu0 0.0
  %529 = vmatpush1.msra.mxu0 %v38
  %530 = vmatprep.subr.mxu0 0.0
  %531 = vmatpush1.msra.mxu0 %v39
  %532 = vmatprep.subr.mxu0 0.0
  %533 = vmatpush1.msra.mxu0 %v40
  %534 = vmatprep.subr.mxu0 0.0
  %535 = vmatpush1.msra.mxu0 %v41
  %536 = vmatprep.subr.mxu0 0.0
  %537 = vmatpush1.msra.mxu0 %v42
  %538 = vmatprep.subr.mxu0 0.0
  %539 = vmatpush1.msra.mxu0 %v43
  %540 = vmatprep.subr.mxu0 0.0
  %541 = vmatpush1.msra.mxu0 %v44
  %542 = vmatprep.subr.mxu0 0.0
  %543 = vmatpush1.msra.mxu0 %v45
  %544 = vmatprep.subr.mxu0 0.0
  %545 = vmatpush1.msra.mxu0 %v46
  %546 = vmatprep.subr.mxu0 0.0
  %547 = vmatpush1.msra.mxu0 %v47
  %548 = vmatprep.subr.mxu0 0.0
  %549 = vmatpush1.msra.mxu0 %v48
  %550 = vmatprep.subr.mxu0 0.0
  %551 = vmatpush1.msra.mxu0 %v49
  %552 = vmatprep.subr.mxu0 0.0
  %553 = vmatpush1.msra.mxu0 %v50
  %554 = vmatprep.subr.mxu0 0.0
  %555 = vmatpush1.msra.mxu0 %v51
  %556 = vmatprep.subr.mxu0 0.0
  %557 = vmatpush1.msra.mxu0 %v52
  %558 = vmatprep.subr.mxu0 0.0
  %559 = vmatpush1.msra.mxu0 0.0
  %560 = vmatprep.subr.mxu0 0.0
  %561 = vmatpush1.msra.mxu0 0.0
  %562 = vmatprep.subr.mxu0 0.0
  %563 = vmatpush1.msra.mxu0 0.0
  %564 = vmatprep.subr.mxu0 0.0
  %565 = vmatpush1.msra.mxu0 0.0
  %566 = vmatprep.subr.mxu0 0.0
  %567 = vmatpush1.msra.mxu0 0.0
  %568 = vmatprep.subr.mxu0 0.0
  %569 = vmatpush1.msra.mxu0 0.0
  %570 = vmatprep.subr.mxu0 0.0
  %571 = vmatpush1.msra.mxu0 0.0
  %572 = vmatprep.subr.mxu0 0.0
  %573 = vmatpush1.msra.mxu0 0.0
  %574 = vmatprep.subr.mxu0 0.0
  %575 = vmatpush1.msra.mxu0 0.0
  %576 = vmatprep.subr.mxu0 0.0
  %577 = vmatpush1.msra.mxu0 0.0
  %578 = vmatprep.subr.mxu0 0.0
  %579 = vmatpush1.msra.mxu0 0.0
  %580 = vmatprep.subr.mxu0 0.0
  %581 = vmatpush1.msra.mxu0 0.0
  %582 = vmatprep.subr.mxu0 0.0
  %583 = vmatpush1.msra.mxu0 0.0
  %584 = vmatprep.subr.mxu0 0.0
  %585 = vmatpush1.msra.mxu0 0.0
  %586 = vmatprep.subr.mxu0 0.0
  %587 = vmatpush1.msra.mxu0 0.0
  %588 = vmatprep.subr.mxu0 0.0
  %589 = vmatpush1.msra.mxu0 0.0
  %590 = vmatprep.mubr.f32.mxu0 0.0
  %591 = vmatmul.mubr.f32.gmra.mrb[0].mxu0 %v523
  %v592 = vpop.f32.mrb[0].mxu0
  %v593 = vadd.f32 0.0, %v592
  %v594 = vpop.f32.mrb[0].mxu0
  %595 = vdwg.mxu0
  %v596 = vadd.f32 %v525, %v593
  %v597 = vmul.f32 %v596, 0.5
  %v598 = vsel %vm36, %v596, %v597
  %v599 = vtanh.pop %v598
  %v600 = vmul.f32 %v599, 0.5
  %v601 = vadd.f32 %v600, 0.5
  %v602 = vsel %vm36, %v599, %v601
  %604 = vrot.lane.b32.xlu0 %v602, 96
  %v605 = vpop.permute.xlu0 %604
  %607 = vrot.lane.b32.xlu0 %v602, 64
  %v608 = vpop.permute.xlu0 %607
  %610 = vrot.lane.b32.xlu0 %v602, 32
  %v611 = vpop.permute.xlu0 %610
  %v613 = vmul.f32 %v605, %v521
  %v614 = vmul.f32 %v602, %v608
  %v615 = vadd.f32 %v613, %v614
  %v616 = vtanh.pop %v615
  %v617 = vmul.f32 %v611, %v616
  %s618 = scalar_lea.vmem %s0, 48
  %v619 = vld [vmem:[%s618] sm:$0xff]
  %620 = vmatprep.subr.mxu0 0.0
  %621 = vmatpush1.msra.mxu0 %v37
  %622 = vmatprep.subr.mxu0 0.0
  %623 = vmatpush1.msra.mxu0 %v38
  %624 = vmatprep.subr.mxu0 0.0
  %625 = vmatpush1.msra.mxu0 %v39
  %626 = vmatprep.subr.mxu0 0.0
  %627 = vmatpush1.msra.mxu0 %v40
  %628 = vmatprep.subr.mxu0 0.0
  %629 = vmatpush1.msra.mxu0 %v41
  %630 = vmatprep.subr.mxu0 0.0
  %631 = vmatpush1.msra.mxu0 %v42
  %632 = vmatprep.subr.mxu0 0.0
  %633 = vmatpush1.msra.mxu0 %v43
  %634 = vmatprep.subr.mxu0 0.0
  %635 = vmatpush1.msra.mxu0 %v44
  %636 = vmatprep.subr.mxu0 0.0
  %637 = vmatpush1.msra.mxu0 %v45
  %638 = vmatprep.subr.mxu0 0.0
  %639 = vmatpush1.msra.mxu0 %v46
  %640 = vmatprep.subr.mxu0 0.0
  %641 = vmatpush1.msra.mxu0 %v47
  %642 = vmatprep.subr.mxu0 0.0
  %643 = vmatpush1.msra.mxu0 %v48
  %644 = vmatprep.subr.mxu0 0.0
  %645 = vmatpush1.msra.mxu0 %v49
  %646 = vmatprep.subr.mxu0 0.0
  %647 = vmatpush1.msra.mxu0 %v50
  %648 = vmatprep.subr.mxu0 0.0
  %649 = vmatpush1.msra.mxu0 %v51
  %650 = vmatprep.subr.mxu0 0.0
  %651 = vmatpush1.msra.mxu0 %v52
  %652 = vmatprep.subr.mxu0 0.0
  %653 = vmatpush1.msra.mxu0 0.0
  %654 = vmatprep.subr.mxu0 0.0
  %655 = vmatpush1.msra.mxu0 0.0
  %656 = vmatprep.subr.mxu0 0.0
  %657 = vmatpush1.msra.mxu0 0.0
  %658 = vmatprep.subr.mxu0 0.0
  %659 = vmatpush1.msra.mxu0 0.0
  %660 = vmatprep.subr.mxu0 0.0
  %661 = vmatpush1.msra.mxu0 0.0
  %662 = vmatprep.subr.mxu0 0.0
  %663 = vmatpush1.msra.mxu0 0.0
  %664 = vmatprep.subr.mxu0 0.0
  %665 = vmatpush1.msra.mxu0 0.0
  %666 = vmatprep.subr.mxu0 0.0
  %667 = vmatpush1.msra.mxu0 0.0
  %668 = vmatprep.subr.mxu0 0.0
  %669 = vmatpush1.msra.mxu0 0.0
  %670 = vmatprep.subr.mxu0 0.0
  %671 = vmatpush1.msra.mxu0 0.0
  %672 = vmatprep.subr.mxu0 0.0
  %673 = vmatpush1.msra.mxu0 0.0
  %674 = vmatprep.subr.mxu0 0.0
  %675 = vmatpush1.msra.mxu0 0.0
  %676 = vmatprep.subr.mxu0 0.0
  %677 = vmatpush1.msra.mxu0 0.0
  %678 = vmatprep.subr.mxu0 0.0
  %679 = vmatpush1.msra.mxu0 0.0
  %680 = vmatprep.subr.mxu0 0.0
  %681 = vmatpush1.msra.mxu0 0.0
  %682 = vmatprep.subr.mxu0 0.0
  %683 = vmatpush1.msra.mxu0 0.0
  %684 = vmatprep.mubr.f32.mxu0 0.0
  %685 = vmatmul.mubr.f32.gmra.mrb[0].mxu0 %v617
  %v686 = vpop.f32.mrb[0].mxu0
  %v687 = vadd.f32 0.0, %v686
  %v688 = vpop.f32.mrb[0].mxu0
  %689 = vdwg.mxu0
  %v690 = vadd.f32 %v619, %v687
  %v691 = vmul.f32 %v690, 0.5
  %v692 = vsel %vm36, %v690, %v691
  %v693 = vtanh.pop %v692
  %v694 = vmul.f32 %v693, 0.5
  %v695 = vadd.f32 %v694, 0.5
  %v696 = vsel %vm36, %v693, %v695
  %698 = vrot.lane.b32.xlu0 %v696, 96
  %v699 = vpop.permute.xlu0 %698
  %701 = vrot.lane.b32.xlu0 %v696, 64
  %v702 = vpop.permute.xlu0 %701
  %704 = vrot.lane.b32.xlu0 %v696, 32
  %v705 = vpop.permute.xlu0 %704
  %v707 = vmul.f32 %v699, %v615
  %v708 = vmul.f32 %v696, %v702
  %v709 = vadd.f32 %v707, %v708
  %v710 = vtanh.pop %v709
  %v711 = vmul.f32 %v705, %v710
  %s712 = scalar_lea.vmem %s0, 56
  %v713 = vld [vmem:[%s712] sm:$0xff]
  %714 = vmatprep.subr.mxu0 0.0
  %715 = vmatpush1.msra.mxu0 %v37
  %716 = vmatprep.subr.mxu0 0.0
  %717 = vmatpush1.msra.mxu0 %v38
  %718 = vmatprep.subr.mxu0 0.0
  %719 = vmatpush1.msra.mxu0 %v39
  %720 = vmatprep.subr.mxu0 0.0
  %721 = vmatpush1.msra.mxu0 %v40
  %722 = vmatprep.subr.mxu0 0.0
  %723 = vmatpush1.msra.mxu0 %v41
  %724 = vmatprep.subr.mxu0 0.0
  %725 = vmatpush1.msra.mxu0 %v42
  %726 = vmatprep.subr.mxu0 0.0
  %727 = vmatpush1.msra.mxu0 %v43
  %728 = vmatprep.subr.mxu0 0.0
  %729 = vmatpush1.msra.mxu0 %v44
  %730 = vmatprep.subr.mxu0 0.0
  %731 = vmatpush1.msra.mxu0 %v45
  %732 = vmatprep.subr.mxu0 0.0
  %733 = vmatpush1.msra.mxu0 %v46
  %734 = vmatprep.subr.mxu0 0.0
  %735 = vmatpush1.msra.mxu0 %v47
  %736 = vmatprep.subr.mxu0 0.0
  %737 = vmatpush1.msra.mxu0 %v48
  %738 = vmatprep.subr.mxu0 0.0
  %739 = vmatpush1.msra.mxu0 %v49
  %740 = vmatprep.subr.mxu0 0.0
  %741 = vmatpush1.msra.mxu0 %v50
  %742 = vmatprep.subr.mxu0 0.0
  %743 = vmatpush1.msra.mxu0 %v51
  %744 = vmatprep.subr.mxu0 0.0
  %745 = vmatpush1.msra.mxu0 %v52
  %746 = vmatprep.subr.mxu0 0.0
  %747 = vmatpush1.msra.mxu0 0.0
  %748 = vmatprep.subr.mxu0 0.0
  %749 = vmatpush1.msra.mxu0 0.0
  %750 = vmatprep.subr.mxu0 0.0
  %751 = vmatpush1.msra.mxu0 0.0
  %752 = vmatprep.subr.mxu0 0.0
  %753 = vmatpush1.msra.mxu0 0.0
  %754 = vmatprep.subr.mxu0 0.0
  %755 = vmatpush1.msra.mxu0 0.0
  %756 = vmatprep.subr.mxu0 0.0
  %757 = vmatpush1.msra.mxu0 0.0
  %758 = vmatprep.subr.mxu0 0.0
  %759 = vmatpush1.msra.mxu0 0.0
  %760 = vmatprep.subr.mxu0 0.0
  %761 = vmatpush1.msra.mxu0 0.0
  %762 = vmatprep.subr.mxu0 0.0
  %763 = vmatpush1.msra.mxu0 0.0
  %764 = vmatprep.subr.mxu0 0.0
  %765 = vmatpush1.msra.mxu0 0.0
  %766 = vmatprep.subr.mxu0 0.0
  %767 = vmatpush1.msra.mxu0 0.0
  %768 = vmatprep.subr.mxu0 0.0
  %769 = vmatpush1.msra.mxu0 0.0
  %770 = vmatprep.subr.mxu0 0.0
  %771 = vmatpush1.msra.mxu0 0.0
  %772 = vmatprep.subr.mxu0 0.0
  %773 = vmatpush1.msra.mxu0 0.0
  %774 = vmatprep.subr.mxu0 0.0
  %775 = vmatpush1.msra.mxu0 0.0
  %776 = vmatprep.subr.mxu0 0.0
  %777 = vmatpush1.msra.mxu0 0.0
  %778 = vmatprep.mubr.f32.mxu0 0.0
  %779 = vmatmul.mubr.f32.gmra.mrb[0].mxu0 %v711
  %v780 = vpop.f32.mrb[0].mxu0
  %v781 = vadd.f32 0.0, %v780
  %v782 = vpop.f32.mrb[0].mxu0
  %783 = vdwg.mxu0
  %v784 = vadd.f32 %v713, %v781
  %v785 = vmul.f32 %v784, 0.5
  %v786 = vsel %vm36, %v784, %v785
  %v787 = vtanh.pop %v786
  %v788 = vmul.f32 %v787, 0.5
  %v789 = vadd.f32 %v788, 0.5
  %v790 = vsel %vm36, %v787, %v789
  %792 = vrot.lane.b32.xlu0 %v790, 96
  %v793 = vpop.permute.xlu0 %792
  %795 = vrot.lane.b32.xlu0 %v790, 64
  %v796 = vpop.permute.xlu0 %795
  %798 = vrot.lane.b32.xlu0 %v790, 32
  %v799 = vpop.permute.xlu0 %798
  %v801 = vmul.f32 %v793, %v709
  %v802 = vmul.f32 %v790, %v796
  %v803 = vadd.f32 %v801, %v802
  %v804 = vtanh.pop %v803
  %v805 = vmul.f32 %v799, %v804
  %806 = vst [vmem:[%s9] sm:$0xff] %v805
  %807 = vst [vmem:[%s10] sm:$0xff] %v803
  %v808 = vld [vmem:[%s4] sm:$0xff]
  %v809 = vld [vmem:[%s4 + $0x8] sm:$0xff]
  %v810 = vld [vmem:[%s4 + $0x10] sm:$0xff]
  %v811 = vld [vmem:[%s4 + $0x18] sm:$0xff]
  %v812 = vld [vmem:[%s4 + $0x20] sm:$0xff]
  %v813 = vld [vmem:[%s4 + $0x28] sm:$0xff]
  %v814 = vld [vmem:[%s4 + $0x30] sm:$0xff]
  %v815 = vld [vmem:[%s4 + $0x38] sm:$0xff]
  %v816 = vld [vmem:[%s4 + $0x40] sm:$0xff]
  %v817 = vld [vmem:[%s4 + $0x48] sm:$0xff]
  %v818 = vld [vmem:[%s4 + $0x50] sm:$0xff]
  %v819 = vld [vmem:[%s4 + $0x58] sm:$0xff]
  %v820 = vld [vmem:[%s4 + $0x60] sm:$0xff]
  %v821 = vld [vmem:[%s4 + $0x68] sm:$0xff]
  %v822 = vld [vmem:[%s4 + $0x70] sm:$0xff]
  %v823 = vld [vmem:[%s4 + $0x78] sm:$0xff]
  %v824 = vld [vmem:[%s5] sm:$0x1]
  %v826 = vlaneseq
  %v827 = vshrl.u32 %v826, 7
  %v828 = vsub.s32 0, %v827
  %v829 = vrot.slane %v824, %v828
  %831 = vmatprep.subr.mxu0 0.0
  %832 = vmatpush1.msra.mxu0 %v808
  %833 = vmatprep.subr.mxu0 0.0
  %834 = vmatpush1.msra.mxu0 %v809
  %835 = vmatprep.subr.mxu0 0.0
  %836 = vmatpush1.msra.mxu0 %v810
  %837 = vmatprep.subr.mxu0 0.0
  %838 = vmatpush1.msra.mxu0 %v811
  %839 = vmatprep.subr.mxu0 0.0
  %840 = vmatpush1.msra.mxu0 %v812
  %841 = vmatprep.subr.mxu0 0.0
  %842 = vmatpush1.msra.mxu0 %v813
  %843 = vmatprep.subr.mxu0 0.0
  %844 = vmatpush1.msra.mxu0 %v814
  %845 = vmatprep.subr.mxu0 0.0
  %846 = vmatpush1.msra.mxu0 %v815
  %847 = vmatprep.subr.mxu0 0.0
  %848 = vmatpush1.msra.mxu0 %v816
  %849 = vmatprep.subr.mxu0 0.0
  %850 = vmatpush1.msra.mxu0 %v817
  %851 = vmatprep.subr.mxu0 0.0
  %852 = vmatpush1.msra.mxu0 %v818
  %853 = vmatprep.subr.mxu0 0.0
  %854 = vmatpush1.msra.mxu0 %v819
  %855 = vmatprep.subr.mxu0 0.0
  %856 = vmatpush1.msra.mxu0 %v820
  %857 = vmatprep.subr.mxu0 0.0
  %858 = vmatpush1.msra.mxu0 %v821
  %859 = vmatprep.subr.mxu0 0.0
  %860 = vmatpush1.msra.mxu0 %v822
  %861 = vmatprep.subr.mxu0 0.0
  %862 = vmatpush1.msra.mxu0 %v823
  %863 = vmatprep.subr.mxu0 0.0
  %864 = vmatpush1.msra.mxu0 0.0
  %865 = vmatprep.subr.mxu0 0.0
  %866 = vmatpush1.msra.mxu0 0.0
  %867 = vmatprep.subr.mxu0 0.0
  %868 = vmatpush1.msra.mxu0 0.0
  %869 = vmatprep.subr.mxu0 0.0
  %870 = vmatpush1.msra.mxu0 0.0
  %871 = vmatprep.subr.mxu0 0.0
  %872 = vmatpush1.msra.mxu0 0.0
  %873 = vmatprep.subr.mxu0 0.0
  %874 = vmatpush1.msra.mxu0 0.0
  %875 = vmatprep.subr.mxu0 0.0
  %876 = vmatpush1.msra.mxu0 0.0
  %877 = vmatprep.subr.mxu0 0.0
  %878 = vmatpush1.msra.mxu0 0.0
  %879 = vmatprep.subr.mxu0 0.0
  %880 = vmatpush1.msra.mxu0 0.0
  %881 = vmatprep.subr.mxu0 0.0
  %882 = vmatpush1.msra.mxu0 0.0
  %883 = vmatprep.subr.mxu0 0.0
  %884 = vmatpush1.msra.mxu0 0.0
  %885 = vmatprep.subr.mxu0 0.0
  %886 = vmatpush1.msra.mxu0 0.0
  %887 = vmatprep.subr.mxu0 0.0
  %888 = vmatpush1.msra.mxu0 0.0
  %889 = vmatprep.subr.mxu0 0.0
  %890 = vmatpush1.msra.mxu0 0.0
  %891 = vmatprep.subr.mxu0 0.0
  %892 = vmatpush1.msra.mxu0 0.0
  %893 = vmatprep.subr.mxu0 0.0
  %894 = vmatpush1.msra.mxu0 0.0
  %895 = vmatprep.mubr.f32.mxu0 0.0
  %896 = vmatmul.mubr.f32.gmra.mrb[0].mxu0 %v805
  %v897 = vpop.f32.mrb[0].mxu0
  %v898 = vadd.f32 %v829, %v897
  %v899 = vpop.f32.mrb[0].mxu0
  %900 = vdwg.mxu0
  %vm901 = vcmp.gt.f32.partialorder %v898, 0.0
  %v902 = vmin.f32 %v898, 0.0
  %v903 = vmul.f32 %v902, 1.442695
  %v904 = vpow.pop %v903
  %v905 = vsub.f32 %v904, 1.0
  %v906 = vsel %vm901, %v898, %v905
  %v907 = vld [vmem:[%s6] sm:$0xff]
  %v908 = vld [vmem:[%s6 + $0x8] sm:$0xff]
  %v909 = vld [vmem:[%s6 + $0x10] sm:$0xff]
  %v910 = vld [vmem:[%s6 + $0x18] sm:$0xff]
  %v911 = vld [vmem:[%s6 + $0x20] sm:$0xff]
  %v912 = vld [vmem:[%s6 + $0x28] sm:$0xff]
  %v913 = vld [vmem:[%s6 + $0x30] sm:$0xff]
  %v914 = vld [vmem:[%s6 + $0x38] sm:$0xff]
  %v915 = vld [vmem:[%s6 + $0x40] sm:$0xff]
  %v916 = vld [vmem:[%s6 + $0x48] sm:$0xff]
  %v917 = vld [vmem:[%s6 + $0x50] sm:$0xff]
  %v918 = vld [vmem:[%s6 + $0x58] sm:$0xff]
  %v919 = vld [vmem:[%s6 + $0x60] sm:$0xff]
  %v920 = vld [vmem:[%s6 + $0x68] sm:$0xff]
  %v921 = vld [vmem:[%s6 + $0x70] sm:$0xff]
  %v922 = vld [vmem:[%s6 + $0x78] sm:$0xff]
  %v923 = vld [vmem:[%s7] sm:$0x1]
  %v925 = vlaneseq
  %v926 = vshrl.u32 %v925, 7
  %v927 = vsub.s32 0, %v926
  %v928 = vrot.slane %v923, %v927
  %930 = vmatprep.subr.mxu0 0.0
  %931 = vmatpush1.msra.mxu0 %v907
  %932 = vmatprep.subr.mxu0 0.0
  %933 = vmatpush1.msra.mxu0 %v908
  %934 = vmatprep.subr.mxu0 0.0
  %935 = vmatpush1.msra.mxu0 %v909
  %936 = vmatprep.subr.mxu0 0.0
  %937 = vmatpush1.msra.mxu0 %v910
  %938 = vmatprep.subr.mxu0 0.0
  %939 = vmatpush1.msra.mxu0 %v911
  %940 = vmatprep.subr.mxu0 0.0
  %941 = vmatpush1.msra.mxu0 %v912
  %942 = vmatprep.subr.mxu0 0.0
  %943 = vmatpush1.msra.mxu0 %v913
  %944 = vmatprep.subr.mxu0 0.0
  %945 = vmatpush1.msra.mxu0 %v914
  %946 = vmatprep.subr.mxu0 0.0
  %947 = vmatpush1.msra.mxu0 %v915
  %948 = vmatprep.subr.mxu0 0.0
  %949 = vmatpush1.msra.mxu0 %v916
  %950 = vmatprep.subr.mxu0 0.0
  %951 = vmatpush1.msra.mxu0 %v917
  %952 = vmatprep.subr.mxu0 0.0
  %953 = vmatpush1.msra.mxu0 %v918
  %954 = vmatprep.subr.mxu0 0.0
  %955 = vmatpush1.msra.mxu0 %v919
  %956 = vmatprep.subr.mxu0 0.0
  %957 = vmatpush1.msra.mxu0 %v920
  %958 = vmatprep.subr.mxu0 0.0
  %959 = vmatpush1.msra.mxu0 %v921
  %960 = vmatprep.subr.mxu0 0.0
  %961 = vmatpush1.msra.mxu0 %v922
  %962 = vmatprep.subr.mxu0 0.0
  %963 = vmatpush1.msra.mxu0 0.0
  %964 = vmatprep.subr.mxu0 0.0
  %965 = vmatpush1.msra.mxu0 0.0
  %966 = vmatprep.subr.mxu0 0.0
  %967 = vmatpush1.msra.mxu0 0.0
  %968 = vmatprep.subr.mxu0 0.0
  %969 = vmatpush1.msra.mxu0 0.0
  %970 = vmatprep.subr.mxu0 0.0
  %971 = vmatpush1.msra.mxu0 0.0
  %972 = vmatprep.subr.mxu0 0.0
  %973 = vmatpush1.msra.mxu0 0.0
  %974 = vmatprep.subr.mxu0 0.0
  %975 = vmatpush1.msra.mxu0 0.0
  %976 = vmatprep.subr.mxu0 0.0
  %977 = vmatpush1.msra.mxu0 0.0
  %978 = vmatprep.subr.mxu0 0.0
  %979 = vmatpush1.msra.mxu0 0.0
  %980 = vmatprep.subr.mxu0 0.0
  %981 = vmatpush1.msra.mxu0 0.0
  %982 = vmatprep.subr.mxu0 0.0
  %983 = vmatpush1.msra.mxu0 0.0
  %984 = vmatprep.subr.mxu0 0.0
  %985 = vmatpush1.msra.mxu0 0.0
  %986 = vmatprep.subr.mxu0 0.0
  %987 = vmatpush1.msra.mxu0 0.0
  %988 = vmatprep.subr.mxu0 0.0
  %989 = vmatpush1.msra.mxu0 0.0
  %990 = vmatprep.subr.mxu0 0.0
  %991 = vmatpush1.msra.mxu0 0.0
  %992 = vmatprep.subr.mxu0 0.0
  %993 = vmatpush1.msra.mxu0 0.0
  %994 = vmatprep.mubr.f32.mxu0 0.0
  %995 = vmatmul.mubr.f32.gmra.mrb[0].mxu0 %v906
  %v996 = vpop.f32.mrb[0].mxu0
  %v997 = vadd.f32 %v928, %v996
  %v998 = vpop.f32.mrb[0].mxu0
  %999 = vdwg.mxu0
  %v1000 = vxor.u32 %v997, 2147483648
  %v1001 = vmul.f32 %v1000, 1.442695
  %v1002 = vpow.pop %v1001
  %v1003 = vadd.f32 %v1002, 1.0
  %v1004 = vrcp.pop %v1003
  %v1005 = vmul.f32 1.0, %v1004
  %1006 = vst [vmem:[%s8] sm:$0xff] %v1005
  // Predicated region
  $region34: #{task1_forward.1} parent=0 // pred_check
    _
  $region35: #{task1_forward.1} parent=0 // pred_check_branch
    %1008 = sbr.rel (0) target = $region37
  $region36: #{task1_forward.1} parent=0 // pred_region
    _
  $region37: #{task1_forward.1} parent=0 // pred_fallthru
    _
  // Predicated region
  $region38: #{task1_forward.1} parent=0 // pred_check
    _
  $region39: #{task1_forward.1} parent=0 // pred_check_branch
    %1010 = sbr.rel (0) target = $region41
  $region40: #{task1_forward.1} parent=0 // pred_region
    _
  $region41: #{task1_forward.1} parent=0 // pred_fallthru
    _
  // Predicated region
  $region42: #{task1_forward.1} parent=0 // pred_check
    _
  $region43: #{task1_forward.1} parent=0 // pred_check_branch
    %1012 = sbr.rel (0) target = $region45
  $region44: #{task1_forward.1} parent=0 // pred_region
    _
  $region45: #{task1_forward.1} parent=0 // pred_fallthru
    _
  // Predicated region
  $region46: #{task1_forward.1} parent=0 // pred_check
    _
  $region47: #{task1_forward.1} parent=0 // pred_check_branch
    %1014 = sbr.rel (0) target = $region49
  $region48: #{task1_forward.1} parent=0 // pred_region
    _
  $region49: #{task1_forward.1} parent=0 // pred_fallthru
    _
  // Predicated region
  $region50: #{task1_forward.1} parent=0 // pred_check
    _
  $region51: #{task1_forward.1} parent=0 // pred_check_branch
    %1016 = sbr.rel (0) target = $region53
  $region52: #{task1_forward.1} parent=0 // pred_region
    _
  $region53: #{task1_forward.1} parent=0 // pred_fallthru
    _
  // Predicated region
  $region54: #{task1_forward.1} parent=0 // pred_check
    _
  $region55: #{task1_forward.1} parent=0 // pred_check_branch
    %1018 = sbr.rel (0) target = $region57
  $region56: #{task1_forward.1} parent=0 // pred_region
    _
  $region57: #{task1_forward.1} parent=0 // pred_fallthru
    _

</llo_original>
